<compile_context>
chip_gen: v6e
topology: v6e:2x2x1
jax: 0.10.0
libtpu: 0.0.40
codegen_flags: <defaults>
</compile_context>

<pallas_src>
import numpy as np
import jax
import jax.numpy as jnp
from jax.experimental import pallas as pl
from jax.experimental.pallas import tpu as pltpu


# ----------------------------------------------------------------------------
# Fused per-image kernel (one grid step = one batch element).
# ----------------------------------------------------------------------------
def _fused_forward_kernel(patches_ref, w1_ref, pg_ref, w2_ref, wfc1_ref, pp_ref,
                          out_ref, g36_ref, c2l_ref, y2_ref, f1l_ref):
    f32 = jnp.float32
    bf16 = jnp.bfloat16

    # conv1: im2col matmul (bf16 x bf16 -> f32 acc) + bias + ReLU.
    b1 = pp_ref[0:1, 0:16]                                        # (1, 16) f32
    y1 = jnp.dot(patches_ref[0], w1_ref[...], preferred_element_type=f32)
    y1 = jnp.maximum(y1 + b1, 0.0).astype(bf16)                   # (484, 16) bf16

    # pool1 (22->6) + conv2 patch gather: ONE bf16 MXU matmul (f32 acc).
    # Row order of pg / g36 is t*4 + p with tap t = kh*3+kw, pos p = oh2*2+ow2.
    g36_ref[...] = jnp.dot(pg_ref[...], y1, preferred_element_type=f32)  # (36,16)

    # Relayout (36,16)[t*4+p, c] -> (4,144)[p, t*16+c] via static ref copies
    # (4-row reads never cross an 8-sublane tile; 16-lane masked stores).
    for t in range(9):
        c2l_ref[:, 16 * t:16 * (t + 1)] = g36_ref[4 * t:4 * (t + 1), :]

    # conv2: single (4,144)x(144,32) bf16 dot + bias + ReLU.
    b2 = pp_ref[1:2, 0:32]                                        # (1, 32) f32
    y2_ref[...] = jnp.maximum(
        jnp.dot(c2l_ref[...].astype(bf16), w2_ref[...],
                preferred_element_type=f32) + b2, 0.0)            # (4, 32) f32

    # Relayout (4,32)[p, co] -> (1,128)[0, p*32+co] (lane-exact fc1 K).
    for p in range(4):
        f1l_ref[:, 32 * p:32 * (p + 1)] = y2_ref[p:p + 1, :]

    # fc1 (pool2 2->6 replication + NCHW flatten folded into weights): one dot.
    bfc1 = pp_ref[2:3, 0:100]                                     # (1, 100) f32
    h = jnp.maximum(
        jnp.dot(f1l_ref[...].astype(bf16), wfc1_ref[...],
                preferred_element_type=f32) + bfc1, 0.0)          # (1, 100) f32

    # fc2 (N=1) folded into the epilogue: f32 elementwise mul + lane reduction.
    wfc2 = pp_ref[3:4, 0:100]                                     # (1, 100) f32
    bfc2 = pp_ref[4:5, 0:1]                                       # (1, 1)   f32
    out_ref[0] = jnp.sum(h * wfc2, axis=1, keepdims=True) + bfc2  # (1, 1)


# ----------------------------------------------------------------------------
# One-time host-side parameter preparation (layout / folding, batch-independent)
# ----------------------------------------------------------------------------
def _adaptive_pool_matrix(in_size, out_size):
    """Exact nn.AdaptiveAvgPool2d bin matrix (out_size, in_size)."""
    P = np.zeros((out_size, in_size), dtype=np.float32)
    for o in range(out_size):
        s = (o * in_size) // out_size
        e = -(-((o + 1) * in_size) // out_size)   # ceil div
        P[o, s:e] = 1.0 / (e - s)
    return P


def _build_pool1_conv2_gather():
    """(36, 484): AdaptiveAvgPool2d(22->6) fused with the conv2 3x3/stride-2
    im2col row gather. Row index = t*4 + p, t = kh*3+kw, p = oh2*2+ow2.
    Columns are conv1 output spatial positions oh*22 + ow (per image)."""
    P = _adaptive_pool_matrix(22, 6)
    M = np.zeros((36, 484), dtype=np.float32)
    for t in range(9):
        i, j = divmod(t, 3)
        for p in range(4):
            oh2, ow2 = divmod(p, 2)
            M[t * 4 + p] = np.kron(P[2 * oh2 + i], P[2 * ow2 + j])
    return M


def _build_fc1_eff(fc1_w):
    """Fold AdaptiveAvgPool2d(2->6) (pure replication) + the torch NCHW flatten
    into fc1: returns (4*32, 100) with row index p*32 + c, p = oh2*2+ow2."""
    w = np.asarray(fc1_w, dtype=np.float32).reshape(100, 32, 6, 6)
    A = np.zeros((4, 32, 100), dtype=np.float32)
    for p in range(4):
        oh2, ow2 = divmod(p, 2)
        blk = w[:, :, 3 * oh2:3 * oh2 + 3, 3 * ow2:3 * ow2 + 3]  # (100, 32, 3, 3)
        A[p] = blk.sum(axis=(2, 3)).T                            # (32, 100)
    return A.reshape(4 * 32, 100)


def prepare_params(params):
    """Pre-lay-out / pre-fold all weights once (hoisted out of the forward).
    Batch-independent: the same prep works for any batch size."""
    w1 = jnp.transpose(params["conv1_w"], (2, 3, 1, 0)).reshape(75, 16)
    w2 = jnp.transpose(params["conv2_w"], (2, 3, 1, 0)).reshape(144, 32)
    # Pack the five tiny tensors into one (8, 128) f32 buffer (one DMA).
    pp = np.zeros((8, 128), dtype=np.float32)
    pp[0, :16] = np.asarray(params["conv1_b"], dtype=np.float32)
    pp[1, :32] = np.asarray(params["conv2_b"], dtype=np.float32)
    pp[2, :100] = np.asarray(params["fc1_b"], dtype=np.float32)
    pp[3, :100] = np.asarray(params["fc2_w"], dtype=np.float32).reshape(-1)
    pp[4, 0] = float(np.asarray(params["fc2_b"], dtype=np.float32).reshape(-1)[0])
    return {
        "w1": w1.astype(jnp.bfloat16),
        "pg": jnp.asarray(_build_pool1_conv2_gather(), dtype=jnp.bfloat16),
        "w2": w2.astype(jnp.bfloat16),
        "wfc1": jnp.asarray(_build_fc1_eff(params["fc1_w"]), dtype=jnp.bfloat16),
        "pp": jnp.asarray(pp),
    }


# ----------------------------------------------------------------------------
# Per-call input prep + the fused forward
# ----------------------------------------------------------------------------
def _conv1_patches(x_nchw):
    """im2col for conv1 (5x5, stride 2, 48x48 input) -> (B, 484, 75) bf16.
    Column order (kh, kw, cin) matches the reshaped conv1 weights."""
    b = x_nchw.shape[0]
    x = jnp.transpose(x_nchw, (0, 2, 3, 1)).astype(jnp.bfloat16)  # NHWC, bf16 early
    cols = [x[:, i:i + 43:2, j:j + 43:2, :]                       # (B, 22, 22, 3)
            for i in range(5) for j in range(5)]
    p = jnp.stack(cols, axis=3)                                   # (B, 22, 22, 25, 3)
    return p.reshape(b, 484, 75)


def vision_model_forward(x_nchw, prep):
    assert x_nchw.shape[1:] == (3, 48, 48), x_nchw.shape
    batch = x_nchw.shape[0]
    patches = _conv1_patches(x_nchw)                              # (B, 484, 75) bf16

    out3 = pl.pallas_call(
        _fused_forward_kernel,
        out_shape=jax.ShapeDtypeStruct((batch, 1, 1), jnp.float32),
        grid_spec=pltpu.PrefetchScalarGridSpec(
            num_scalar_prefetch=0,
            grid=(batch,),
            in_specs=[
                pl.BlockSpec((1, 484, 75), lambda b: (b, 0, 0)),   # patches (per image)
                pl.BlockSpec((75, 16), lambda b: (0, 0)),          # w1
                pl.BlockSpec((36, 484), lambda b: (0, 0)),         # pg (bf16, batch-free)
                pl.BlockSpec((144, 32), lambda b: (0, 0)),         # w2
                pl.BlockSpec((128, 100), lambda b: (0, 0)),        # wfc1 (folded)
                pl.BlockSpec((8, 128), lambda b: (0, 0)),          # packed small params
            ],
            out_specs=pl.BlockSpec((1, 1, 1), lambda b: (b, 0, 0)),
            scratch_shapes=[
                pltpu.VMEM((36, 16), jnp.float32),   # pool/gather result
                pltpu.VMEM((4, 144), jnp.float32),   # conv2 lhs relayout
                pltpu.VMEM((4, 32), jnp.float32),    # conv2 output
                pltpu.VMEM((1, 128), jnp.float32),   # fc1 lhs relayout
            ],
        ),
        compiler_params=pltpu.CompilerParams(
            dimension_semantics=("parallel",)),      # batch items independent
    )(patches, prep["w1"], prep["pg"], prep["w2"], prep["wfc1"], prep["pp"])
    return out3.reshape(batch, 1)


# ----------------------------------------------------------------------------
# Pure-JAX f32 reference (correctness check only)
# ----------------------------------------------------------------------------
def reference_forward(x_nchw, params):
    def conv(x, w, b, stride):
        y = jax.lax.conv_general_dilated(
            x, w, (stride, stride), "VALID",
            dimension_numbers=("NCHW", "OIHW", "NCHW"))
        return jax.nn.relu(y + b[None, :, None, None])

    def pool(x, out_hw):
        B, C, H, W = x.shape
        P = jnp.asarray(np.kron(_adaptive_pool_matrix(H, out_hw[0]),
                                _adaptive_pool_matrix(W, out_hw[1])))
        y = jnp.einsum("op,bcp->bco", P, x.reshape(B, C, H * W))
        return y.reshape(B, C, out_hw[0], out_hw[1])

    x = pool(conv(x_nchw, params["conv1_w"], params["conv1_b"], 2), (6, 6))
    x = pool(conv(x, params["conv2_w"], params["conv2_b"], 2), (6, 6))
    x = x.reshape(x.shape[0], -1)
    x = jax.nn.relu(x @ params["fc1_w"].T + params["fc1_b"])
    return x @ params["fc2_w"].T + params["fc2_b"]


# ----------------------------------------------------------------------------
# Deterministic parameter initialization (same shapes as the torch module)
# ----------------------------------------------------------------------------
def init_params(key):
    ks = jax.random.split(key, 8)

    def norm(k, shape, scale):
        return (scale * jax.random.normal(k, shape)).astype(jnp.float32)

    return {
        "conv1_w": norm(ks[0], (16, 3, 5, 5), 0.1),
        "conv1_b": norm(ks[1], (16,), 0.1),
        "conv2_w": norm(ks[2], (32, 16, 3, 3), 0.1),
        "conv2_b": norm(ks[3], (32,), 0.1),
        "fc1_w":   norm(ks[4], (100, 32 * 6 * 6), 0.05),
        "fc1_b":   norm(ks[5], (100,), 0.05),
        "fc2_w":   norm(ks[6], (1, 100), 0.05),
        "fc2_b":   norm(ks[7], (1,), 0.05),
    }


if __name__ == "__main__":
    key = jax.random.PRNGKey(0)
    pkey, xkey = jax.random.split(key)
    params = init_params(pkey)
    prep = prepare_params(params)      # batch-independent, one-time
    # Input consistent with the module's transform: Resize((48, 48)), 3 channels.
    x = jax.random.normal(xkey, (2, 3, 48, 48), dtype=jnp.float32)

    fwd = jax.jit(vision_model_forward)
    out = jax.block_until_ready(fwd(x, prep))
    assert out.shape == (2, 1), out.shape

    ref = jax.block_until_ready(reference_forward(x, params))
    # bf16 matmul operands (patches/w1/pg/w2/wfc1) with f32 accumulation and a
    # pure-f32 fc1/fc2 epilogue -> relaxed tolerance vs the f32 reference.
    np.testing.assert_allclose(np.asarray(out), np.asarray(ref),
                               rtol=5e-2, atol=5e-2)
    print("KERNEL_OK")
</pallas_src>

<mosaic_0001>
module attributes {stable_mosaic.version = 11 : i64} {
  func.func @_fused_forward_kernel(%arg0: i32, %arg1: memref<1x484x75xbf16, #tpu.memory_space<vmem>>, %arg2: memref<75x16xbf16, #tpu.memory_space<vmem>>, %arg3: memref<36x484xbf16, #tpu.memory_space<vmem>>, %arg4: memref<144x32xbf16, #tpu.memory_space<vmem>>, %arg5: memref<128x100xbf16, #tpu.memory_space<vmem>>, %arg6: memref<8x128xf32, #tpu.memory_space<vmem>>, %arg7: memref<1x1x1xf32, #tpu.memory_space<vmem>>, %arg8: memref<36x16xf32, #tpu.memory_space<vmem>>, %arg9: memref<4x144xf32, #tpu.memory_space<vmem>>, %arg10: memref<4x32xf32, #tpu.memory_space<vmem>>, %arg11: memref<1x128xf32, #tpu.memory_space<vmem>>) attributes {dimension_semantics = [#tpu.dimension_semantics<parallel>], iteration_bounds = array<i64: 2>, scalar_prefetch = 0 : i64, scratch_operands = 4 : i64, tpu.core_type = #tpu.core_type<tc>, window_params = [{transform_indices = @transform_0, window_bounds = array<i64: 1, 484, 75>}, {pipeline_mode = #tpu.pipeline_mode<synchronous>, transform_indices = @transform_1, window_bounds = array<i64: 75, 16>}, {pipeline_mode = #tpu.pipeline_mode<synchronous>, transform_indices = @transform_2, window_bounds = array<i64: 36, 484>}, {pipeline_mode = #tpu.pipeline_mode<synchronous>, transform_indices = @transform_3, window_bounds = array<i64: 144, 32>}, {pipeline_mode = #tpu.pipeline_mode<synchronous>, transform_indices = @transform_4, window_bounds = array<i64: 128, 100>}, {pipeline_mode = #tpu.pipeline_mode<synchronous>, transform_indices = @transform_5, window_bounds = array<i64: 8, 128>}, {transform_indices = @transform_6, window_bounds = array<i64: 1, 1, 1>}]} {
    %c0 = arith.constant 0 : index
    %c0_0 = arith.constant 0 : index
    %0 = vector.load %arg6[%c0, %c0_0] : memref<8x128xf32, #tpu.memory_space<vmem>>, vector<1x16xf32>
    %c0_1 = arith.constant 0 : index
    %c0_2 = arith.constant 0 : index
    %c0_3 = arith.constant 0 : index
    %1 = vector.load %arg1[%c0_1, %c0_2, %c0_3] : memref<1x484x75xbf16, #tpu.memory_space<vmem>>, vector<1x484x75xbf16>
    %2 = vector.shape_cast %1 : vector<1x484x75xbf16> to vector<484x75xbf16>
    %c0_4 = arith.constant 0 : index
    %c0_5 = arith.constant 0 : index
    %3 = vector.load %arg2[%c0_4, %c0_5] : memref<75x16xbf16, #tpu.memory_space<vmem>>, vector<75x16xbf16>
    %cst = arith.constant dense<0.000000e+00> : vector<484x16xf32>
    %4 = tpu.matmul %2, %3, %cst {dimension_numbers = #tpu.dot_dimension_numbers<[1], [0], [0], [1], [0, 0, 1, 1], [], []>} : vector<484x75xbf16>, vector<75x16xbf16>, vector<484x16xf32> -> vector<484x16xf32>
    %5 = vector.broadcast %0 : vector<1x16xf32> to vector<484x16xf32>
    %6 = arith.addf %4, %5 : vector<484x16xf32>
    %cst_6 = arith.constant 0.000000e+00 : f32
    %7 = vector.broadcast %cst_6 : f32 to vector<484x16xf32>
    %8 = arith.maximumf %6, %7 : vector<484x16xf32>
    %9 = arith.truncf %8 : vector<484x16xf32> to vector<484x16xbf16>
    %c0_7 = arith.constant 0 : index
    %c0_8 = arith.constant 0 : index
    %10 = vector.load %arg3[%c0_7, %c0_8] : memref<36x484xbf16, #tpu.memory_space<vmem>>, vector<36x484xbf16>
    %cst_9 = arith.constant dense<0.000000e+00> : vector<36x16xf32>
    %11 = tpu.matmul %10, %9, %cst_9 {dimension_numbers = #tpu.dot_dimension_numbers<[1], [0], [0], [1], [0, 0, 1, 1], [], []>} : vector<36x484xbf16>, vector<484x16xbf16>, vector<36x16xf32> -> vector<36x16xf32>
    %c0_10 = arith.constant 0 : index
    %c0_11 = arith.constant 0 : index
    %12 = vector.load %arg8[%c0_10, %c0_11] : memref<36x16xf32, #tpu.memory_space<vmem>>, vector<36x16xf32>
    tpu.vector_store %arg8[%c0_10, %c0_11], %11 {strides = array<i32>} : memref<36x16xf32, #tpu.memory_space<vmem>>, vector<36x16xf32>,
    %c0_12 = arith.constant 0 : index
    %c0_13 = arith.constant 0 : index
    %13 = vector.load %arg8[%c0_12, %c0_13] : memref<36x16xf32, #tpu.memory_space<vmem>>, vector<4x16xf32>
    %c0_14 = arith.constant 0 : index
    %c0_15 = arith.constant 0 : index
    %14 = vector.load %arg9[%c0_14, %c0_15] : memref<4x144xf32, #tpu.memory_space<vmem>>, vector<4x16xf32>
    tpu.vector_store %arg9[%c0_14, %c0_15], %13 {strides = array<i32>} : memref<4x144xf32, #tpu.memory_space<vmem>>, vector<4x16xf32>,
    %c4 = arith.constant 4 : index
    %c0_16 = arith.constant 0 : index
    %15 = vector.load %arg8[%c4, %c0_16] : memref<36x16xf32, #tpu.memory_space<vmem>>, vector<4x16xf32>
    %c0_17 = arith.constant 0 : index
    %c16 = arith.constant 16 : index
    %16 = vector.load %arg9[%c0_17, %c16] : memref<4x144xf32, #tpu.memory_space<vmem>>, vector<4x16xf32>
    tpu.vector_store %arg9[%c0_17, %c16], %15 {strides = array<i32>} : memref<4x144xf32, #tpu.memory_space<vmem>>, vector<4x16xf32>,
    %c8 = arith.constant 8 : index
    %c0_18 = arith.constant 0 : index
    %17 = vector.load %arg8[%c8, %c0_18] : memref<36x16xf32, #tpu.memory_space<vmem>>, vector<4x16xf32>
    %c0_19 = arith.constant 0 : index
    %c32 = arith.constant 32 : index
    %18 = vector.load %arg9[%c0_19, %c32] : memref<4x144xf32, #tpu.memory_space<vmem>>, vector<4x16xf32>
    tpu.vector_store %arg9[%c0_19, %c32], %17 {strides = array<i32>} : memref<4x144xf32, #tpu.memory_space<vmem>>, vector<4x16xf32>,
    %c12 = arith.constant 12 : index
    %c0_20 = arith.constant 0 : index
    %19 = vector.load %arg8[%c12, %c0_20] : memref<36x16xf32, #tpu.memory_space<vmem>>, vector<4x16xf32>
    %c0_21 = arith.constant 0 : index
    %c48 = arith.constant 48 : index
    %20 = vector.load %arg9[%c0_21, %c48] : memref<4x144xf32, #tpu.memory_space<vmem>>, vector<4x16xf32>
    tpu.vector_store %arg9[%c0_21, %c48], %19 {strides = array<i32>} : memref<4x144xf32, #tpu.memory_space<vmem>>, vector<4x16xf32>,
    %c16_22 = arith.constant 16 : index
    %c0_23 = arith.constant 0 : index
    %21 = vector.load %arg8[%c16_22, %c0_23] : memref<36x16xf32, #tpu.memory_space<vmem>>, vector<4x16xf32>
    %c0_24 = arith.constant 0 : index
    %c64 = arith.constant 64 : index
    %22 = vector.load %arg9[%c0_24, %c64] : memref<4x144xf32, #tpu.memory_space<vmem>>, vector<4x16xf32>
    tpu.vector_store %arg9[%c0_24, %c64], %21 {strides = array<i32>} : memref<4x144xf32, #tpu.memory_space<vmem>>, vector<4x16xf32>,
    %c20 = arith.constant 20 : index
    %c0_25 = arith.constant 0 : index
    %23 = vector.load %arg8[%c20, %c0_25] : memref<36x16xf32, #tpu.memory_space<vmem>>, vector<4x16xf32>
    %c0_26 = arith.constant 0 : index
    %c80 = arith.constant 80 : index
    %24 = vector.load %arg9[%c0_26, %c80] : memref<4x144xf32, #tpu.memory_space<vmem>>, vector<4x16xf32>
    tpu.vector_store %arg9[%c0_26, %c80], %23 {strides = array<i32>} : memref<4x144xf32, #tpu.memory_space<vmem>>, vector<4x16xf32>,
    %c24 = arith.constant 24 : index
    %c0_27 = arith.constant 0 : index
    %25 = vector.load %arg8[%c24, %c0_27] : memref<36x16xf32, #tpu.memory_space<vmem>>, vector<4x16xf32>
    %c0_28 = arith.constant 0 : index
    %c96 = arith.constant 96 : index
    %26 = vector.load %arg9[%c0_28, %c96] : memref<4x144xf32, #tpu.memory_space<vmem>>, vector<4x16xf32>
    tpu.vector_store %arg9[%c0_28, %c96], %25 {strides = array<i32>} : memref<4x144xf32, #tpu.memory_space<vmem>>, vector<4x16xf32>,
    %c28 = arith.constant 28 : index
    %c0_29 = arith.constant 0 : index
    %27 = vector.load %arg8[%c28, %c0_29] : memref<36x16xf32, #tpu.memory_space<vmem>>, vector<4x16xf32>
    %c0_30 = arith.constant 0 : index
    %c112 = arith.constant 112 : index
    %28 = vector.load %arg9[%c0_30, %c112] : memref<4x144xf32, #tpu.memory_space<vmem>>, vector<4x16xf32>
    tpu.vector_store %arg9[%c0_30, %c112], %27 {strides = array<i32>} : memref<4x144xf32, #tpu.memory_space<vmem>>, vector<4x16xf32>,
    %c32_31 = arith.constant 32 : index
    %c0_32 = arith.constant 0 : index
    %29 = vector.load %arg8[%c32_31, %c0_32] : memref<36x16xf32, #tpu.memory_space<vmem>>, vector<4x16xf32>
    %c0_33 = arith.constant 0 : index
    %c128 = arith.constant 128 : index
    %30 = vector.load %arg9[%c0_33, %c128] : memref<4x144xf32, #tpu.memory_space<vmem>>, vector<4x16xf32>
    tpu.vector_store %arg9[%c0_33, %c128], %29 {strides = array<i32>} : memref<4x144xf32, #tpu.memory_space<vmem>>, vector<4x16xf32>,
    %c1 = arith.constant 1 : index
    %c0_34 = arith.constant 0 : index
    %31 = vector.load %arg6[%c1, %c0_34] : memref<8x128xf32, #tpu.memory_space<vmem>>, vector<1x32xf32>
    %c0_35 = arith.constant 0 : index
    %c0_36 = arith.constant 0 : index
    %32 = vector.load %arg9[%c0_35, %c0_36] : memref<4x144xf32, #tpu.memory_space<vmem>>, vector<4x144xf32>
    %33 = arith.truncf %32 : vector<4x144xf32> to vector<4x144xbf16>
    %c0_37 = arith.constant 0 : index
    %c0_38 = arith.constant 0 : index
    %34 = vector.load %arg4[%c0_37, %c0_38] : memref<144x32xbf16, #tpu.memory_space<vmem>>, vector<144x32xbf16>
    %cst_39 = arith.constant dense<0.000000e+00> : vector<4x32xf32>
    %35 = tpu.matmul %33, %34, %cst_39 {dimension_numbers = #tpu.dot_dimension_numbers<[1], [0], [0], [1], [0, 0, 1, 1], [], []>} : vector<4x144xbf16>, vector<144x32xbf16>, vector<4x32xf32> -> vector<4x32xf32>
    %36 = vector.broadcast %31 : vector<1x32xf32> to vector<4x32xf32>
    %37 = arith.addf %35, %36 : vector<4x32xf32>
    %cst_40 = arith.constant 0.000000e+00 : f32
    %38 = vector.broadcast %cst_40 : f32 to vector<4x32xf32>
    %39 = arith.maximumf %37, %38 : vector<4x32xf32>
    %c0_41 = arith.constant 0 : index
    %c0_42 = arith.constant 0 : index
    %40 = vector.load %arg10[%c0_41, %c0_42] : memref<4x32xf32, #tpu.memory_space<vmem>>, vector<4x32xf32>
    tpu.vector_store %arg10[%c0_41, %c0_42], %39 {strides = array<i32>} : memref<4x32xf32, #tpu.memory_space<vmem>>, vector<4x32xf32>,
    %c0_43 = arith.constant 0 : index
    %c0_44 = arith.constant 0 : index
    %41 = vector.load %arg10[%c0_43, %c0_44] : memref<4x32xf32, #tpu.memory_space<vmem>>, vector<1x32xf32>
    %c0_45 = arith.constant 0 : index
    %c0_46 = arith.constant 0 : index
    %42 = vector.load %arg11[%c0_45, %c0_46] : memref<1x128xf32, #tpu.memory_space<vmem>>, vector<1x32xf32>
    tpu.vector_store %arg11[%c0_45, %c0_46], %41 {strides = array<i32>} : memref<1x128xf32, #tpu.memory_space<vmem>>, vector<1x32xf32>,
    %c1_47 = arith.constant 1 : index
    %c0_48 = arith.constant 0 : index
    %43 = vector.load %arg10[%c1_47, %c0_48] : memref<4x32xf32, #tpu.memory_space<vmem>>, vector<1x32xf32>
    %c0_49 = arith.constant 0 : index
    %c32_50 = arith.constant 32 : index
    %44 = vector.load %arg11[%c0_49, %c32_50] : memref<1x128xf32, #tpu.memory_space<vmem>>, vector<1x32xf32>
    tpu.vector_store %arg11[%c0_49, %c32_50], %43 {strides = array<i32>} : memref<1x128xf32, #tpu.memory_space<vmem>>, vector<1x32xf32>,
    %c2 = arith.constant 2 : index
    %c0_51 = arith.constant 0 : index
    %45 = vector.load %arg10[%c2, %c0_51] : memref<4x32xf32, #tpu.memory_space<vmem>>, vector<1x32xf32>
    %c0_52 = arith.constant 0 : index
    %c64_53 = arith.constant 64 : index
    %46 = vector.load %arg11[%c0_52, %c64_53] : memref<1x128xf32, #tpu.memory_space<vmem>>, vector<1x32xf32>
    tpu.vector_store %arg11[%c0_52, %c64_53], %45 {strides = array<i32>} : memref<1x128xf32, #tpu.memory_space<vmem>>, vector<1x32xf32>,
    %c3 = arith.constant 3 : index
    %c0_54 = arith.constant 0 : index
    %47 = vector.load %arg10[%c3, %c0_54] : memref<4x32xf32, #tpu.memory_space<vmem>>, vector<1x32xf32>
    %c0_55 = arith.constant 0 : index
    %c96_56 = arith.constant 96 : index
    %48 = vector.load %arg11[%c0_55, %c96_56] : memref<1x128xf32, #tpu.memory_space<vmem>>, vector<1x32xf32>
    tpu.vector_store %arg11[%c0_55, %c96_56], %47 {strides = array<i32>} : memref<1x128xf32, #tpu.memory_space<vmem>>, vector<1x32xf32>,
    %c2_57 = arith.constant 2 : index
    %c0_58 = arith.constant 0 : index
    %49 = vector.load %arg6[%c2_57, %c0_58] : memref<8x128xf32, #tpu.memory_space<vmem>>, vector<1x100xf32>
    %c0_59 = arith.constant 0 : index
    %c0_60 = arith.constant 0 : index
    %50 = vector.load %arg11[%c0_59, %c0_60] : memref<1x128xf32, #tpu.memory_space<vmem>>, vector<1x128xf32>
    %51 = arith.truncf %50 : vector<1x128xf32> to vector<1x128xbf16>
    %c0_61 = arith.constant 0 : index
    %c0_62 = arith.constant 0 : index
    %52 = vector.load %arg5[%c0_61, %c0_62] : memref<128x100xbf16, #tpu.memory_space<vmem>>, vector<128x100xbf16>
    %cst_63 = arith.constant dense<0.000000e+00> : vector<1x100xf32>
    %53 = tpu.matmul %51, %52, %cst_63 {dimension_numbers = #tpu.dot_dimension_numbers<[1], [0], [0], [1], [0, 0, 1, 1], [], []>} : vector<1x128xbf16>, vector<128x100xbf16>, vector<1x100xf32> -> vector<1x100xf32>
    %54 = arith.addf %53, %49 : vector<1x100xf32>
    %cst_64 = arith.constant 0.000000e+00 : f32
    %55 = vector.broadcast %cst_64 : f32 to vector<1x100xf32>
    %56 = arith.maximumf %54, %55 : vector<1x100xf32>
    %c3_65 = arith.constant 3 : index
    %c0_66 = arith.constant 0 : index
    %57 = vector.load %arg6[%c3_65, %c0_66] : memref<8x128xf32, #tpu.memory_space<vmem>>, vector<1x100xf32>
    %c4_67 = arith.constant 4 : index
    %c0_68 = arith.constant 0 : index
    %58 = vector.load %arg6[%c4_67, %c0_68] : memref<8x128xf32, #tpu.memory_space<vmem>>, vector<1x1xf32>
    %59 = arith.mulf %56, %57 : vector<1x100xf32>
    %cst_69 = arith.constant dense<0.000000e+00> : vector<1xf32>
    %60 = vector.multi_reduction <add>, %59, %cst_69 [1] : vector<1x100xf32> to vector<1xf32>
    %61 = vector.shape_cast %60 : vector<1xf32> to vector<1x1xf32>
    %62 = arith.addf %61, %58 : vector<1x1xf32>
    %c0_70 = arith.constant 0 : index
    %c0_71 = arith.constant 0 : index
    %c0_72 = arith.constant 0 : index
    %63 = vector.load %arg7[%c0_70, %c0_71, %c0_72] : memref<1x1x1xf32, #tpu.memory_space<vmem>>, vector<1x1x1xf32>
    %64 = vector.shape_cast %63 : vector<1x1x1xf32> to vector<1x1xf32>
    %65 = vector.shape_cast %62 : vector<1x1xf32> to vector<1x1x1xf32>
    tpu.vector_store %arg7[%c0_70, %c0_71, %c0_72], %65 {strides = array<i32>} : memref<1x1x1xf32, #tpu.memory_space<vmem>>, vector<1x1x1xf32>,
    return
  }
  func.func @transform_0(%arg0: i32) -> (i32, i32, i32) {
    %c0_i32 = arith.constant 0 : i32
    %c0_i32_0 = arith.constant 0 : i32
    %c0_i32_1 = arith.constant 0 : i32
    return %arg0, %c0_i32, %c0_i32_0 : i32, i32, i32
  }
  func.func @transform_1(%arg0: i32) -> (i32, i32) {
    %c0_i32 = arith.constant 0 : i32
    %c0_i32_0 = arith.constant 0 : i32
    %c0_i32_1 = arith.constant 0 : i32
    return %c0_i32, %c0_i32_0 : i32, i32
  }
  func.func @transform_2(%arg0: i32) -> (i32, i32) {
    %c0_i32 = arith.constant 0 : i32
    %c0_i32_0 = arith.constant 0 : i32
    %c0_i32_1 = arith.constant 0 : i32
    return %c0_i32, %c0_i32_0 : i32, i32
  }
  func.func @transform_3(%arg0: i32) -> (i32, i32) {
    %c0_i32 = arith.constant 0 : i32
    %c0_i32_0 = arith.constant 0 : i32
    %c0_i32_1 = arith.constant 0 : i32
    return %c0_i32, %c0_i32_0 : i32, i32
  }
  func.func @transform_4(%arg0: i32) -> (i32, i32) {
    %c0_i32 = arith.constant 0 : i32
    %c0_i32_0 = arith.constant 0 : i32
    %c0_i32_1 = arith.constant 0 : i32
    return %c0_i32, %c0_i32_0 : i32, i32
  }
  func.func @transform_5(%arg0: i32) -> (i32, i32) {
    %c0_i32 = arith.constant 0 : i32
    %c0_i32_0 = arith.constant 0 : i32
    %c0_i32_1 = arith.constant 0 : i32
    return %c0_i32, %c0_i32_0 : i32, i32
  }
  func.func @transform_6(%arg0: i32) -> (i32, i32, i32) {
    %c0_i32 = arith.constant 0 : i32
    %c0_i32_0 = arith.constant 0 : i32
    %c0_i32_1 = arith.constant 0 : i32
    return %arg0, %c0_i32, %c0_i32_0 : i32, i32, i32
  }
}

</mosaic_0001>

<llo_original>
// kernel: vision_model_forward.1
$region0: #{vision_model_forward.1}
  #allocation0 [shape = 'u32[]', space=smem, size = 0x4, offset = 0x4, fixed_abs, tag = 'smem constant byte address 0x4 - core index']
  #allocation1 [shape = 'u32[144,128]{1,0:T(1,128)}', space=vmem, size = 0x12000, scoped, tag = 'internal scratch']
  #allocation2 [shape = 'f32[36,16]{1,0:T(8,128)}', space=vmem, size = 0x5000, scoped, tag = 'scratch operand']
  #allocation3 [shape = 'f32[4,144]{1,0:T(4,128)}', space=vmem, size = 0x1000, scoped, tag = 'scratch operand']
  #allocation4 [shape = 'f32[4,32]{1,0:T(4,128)}', space=vmem, size = 0x800, scoped, tag = 'scratch operand']
  #allocation5 [shape = 'f32[1,128]{1,0:T(1,128)}', space=vmem, size = 0x200, scoped, tag = 'scratch operand']
  %s0 = inlined_call_operand.vmem [shape: bf16[2,484,75], index: 0, kind: input, shape index: {}]
  %s1 = inlined_call_operand.vmem [shape: bf16[75,16], index: 1, kind: input, shape index: {}]
  %s2 = inlined_call_operand.vmem [shape: bf16[36,484], index: 2, kind: input, shape index: {}]
  %s3 = inlined_call_operand.vmem [shape: bf16[144,32], index: 3, kind: input, shape index: {}]
  %s4 = inlined_call_operand.vmem [shape: bf16[128,100], index: 4, kind: input, shape index: {}]
  %s5 = inlined_call_operand.vmem [shape: f32[8,128], index: 5, kind: input, shape index: {}]
  %s6 = inlined_call_operand.vmem [shape: f32[2,1,1], index: 6, kind: output, shape index: {}]
  %s7 = sld [smem:[#allocation0]]
  $region57: #{vision_model_forward.1} parent=0
    _
  %s9 = ssub.s32 1, %s7
  %s10 = scalar_select 0, %s9, %s7
  loop: start=0, step=1, limit=4
  $region2: #{vision_model_forward.1} parent=0 // loop_pre_header
    _
  $region3: #{vision_model_forward.1} parent=0 // loop_header
    %s12 = sphi 0, %s16
    %p13 = scmp.ge.s32.totalorder %s12, 4
    %s22 = sphi 0, %s24
    %s25 = sphi 0, %s22
    %s26 = sphi 0, %s25
    %s42 = sphi 0, %s26
    %s46 = sphi 0, %s46
    %s48 = sphi 0, %s46
    %s49 = sphi 0, %s48
    %s63 = sphi 0, %s49
    %s67 = sphi 0, %s67
    %s69 = sphi 0, %s67
    %s70 = sphi 0, %s69
    %s84 = sphi 0, %s70
    %s88 = sphi 0, %s88
    %s90 = sphi 0, %s88
    %s91 = sphi 0, %s90
    %s105 = sphi 0, %s91
    %s109 = sphi 0, %s109
    %s111 = sphi 0, %s109
    %s112 = sphi 0, %s111
    %s126 = sphi 0, %s112
    %s130 = sphi 0, %s130
    %s132 = sphi 0, %s130
    %s133 = sphi 0, %s132
    %s147 = sphi 0, %s133
    %s153 = sphi 0, %s155
    %s156 = sphi 0, %s153
    %s157 = sphi 0, %s156
    %s173 = sphi 0, %s157
  $region4: #{vision_model_forward.1} parent=0 // loop_header_branch
    %15 = sbr.rel (%p13) target = $region8
  $region5: #{vision_model_forward.1} parent=0 // loop_body
    %s17 = ssub.s32 %s12, 1
    %s18 = ssub.s32 %s12, 2
    %s19 = sadd.s32 %s12, 1
    %s20 = ssub.s32 %s12, %s19
    %p21 = scmp.eq.s32.totalorder %s20, 0
    %s23 = sadd.s32 %s22, 1
    %s24 = scalar_select %p21, %s22, %s23
    %p27 = pneg %p21
    %p28 = scmp.eq.s32.totalorder %s12, 1
    %p29 = por %p27, %p28
    %p30 = scmp.ne.s32.totalorder %s22, %s25
    %p31 = scmp.eq.s32.totalorder %s12, 0
    %p32 = por %p30, %p31
    %p33 = scmp.ne.s32.totalorder %s22, %s25
    %p34 = scmp.eq.s32.totalorder %s17, 1
    %p35 = por %p33, %p34
    %p36 = scmp.ne.s32.totalorder %s25, %s26
    %p37 = scmp.eq.s32.totalorder %s17, 0
    %p38 = por %p36, %p37
    %p39 = scmp.ne.s32.totalorder %s25, %s26
    %p40 = scmp.eq.s32.totalorder %s18, 1
    %p41 = por %p39, %p40
    %p43 = scmp.ne.s32.totalorder %s26, %s42
    %p44 = scmp.eq.s32.totalorder %s18, 0
    %p45 = por %p43, %p44
    %s47 = sadd.s32 %s46, 1
    %p50 = scmp.eq.s32.totalorder %s12, 1
    %p51 = scmp.ne.s32.totalorder %s46, %s48
    %p52 = scmp.eq.s32.totalorder %s12, 0
    %p53 = por %p51, %p52
    %p54 = scmp.ne.s32.totalorder %s46, %s48
    %p55 = scmp.eq.s32.totalorder %s17, 1
    %p56 = por %p54, %p55
    %p57 = scmp.ne.s32.totalorder %s48, %s49
    %p58 = scmp.eq.s32.totalorder %s17, 0
    %p59 = por %p57, %p58
    %p60 = scmp.ne.s32.totalorder %s48, %s49
    %p61 = scmp.eq.s32.totalorder %s18, 1
    %p62 = por %p60, %p61
    %p64 = scmp.ne.s32.totalorder %s49, %s63
    %p65 = scmp.eq.s32.totalorder %s18, 0
    %p66 = por %p64, %p65
    %s68 = sadd.s32 %s67, 1
    %p71 = scmp.eq.s32.totalorder %s12, 1
    %p72 = scmp.ne.s32.totalorder %s67, %s69
    %p73 = scmp.eq.s32.totalorder %s12, 0
    %p74 = por %p72, %p73
    %p75 = scmp.ne.s32.totalorder %s67, %s69
    %p76 = scmp.eq.s32.totalorder %s17, 1
    %p77 = por %p75, %p76
    %p78 = scmp.ne.s32.totalorder %s69, %s70
    %p79 = scmp.eq.s32.totalorder %s17, 0
    %p80 = por %p78, %p79
    %p81 = scmp.ne.s32.totalorder %s69, %s70
    %p82 = scmp.eq.s32.totalorder %s18, 1
    %p83 = por %p81, %p82
    %p85 = scmp.ne.s32.totalorder %s70, %s84
    %p86 = scmp.eq.s32.totalorder %s18, 0
    %p87 = por %p85, %p86
    %s89 = sadd.s32 %s88, 1
    %p92 = scmp.eq.s32.totalorder %s12, 1
    %p93 = scmp.ne.s32.totalorder %s88, %s90
    %p94 = scmp.eq.s32.totalorder %s12, 0
    %p95 = por %p93, %p94
    %p96 = scmp.ne.s32.totalorder %s88, %s90
    %p97 = scmp.eq.s32.totalorder %s17, 1
    %p98 = por %p96, %p97
    %p99 = scmp.ne.s32.totalorder %s90, %s91
    %p100 = scmp.eq.s32.totalorder %s17, 0
    %p101 = por %p99, %p100
    %p102 = scmp.ne.s32.totalorder %s90, %s91
    %p103 = scmp.eq.s32.totalorder %s18, 1
    %p104 = por %p102, %p103
    %p106 = scmp.ne.s32.totalorder %s91, %s105
    %p107 = scmp.eq.s32.totalorder %s18, 0
    %p108 = por %p106, %p107
    %s110 = sadd.s32 %s109, 1
    %p113 = scmp.eq.s32.totalorder %s12, 1
    %p114 = scmp.ne.s32.totalorder %s109, %s111
    %p115 = scmp.eq.s32.totalorder %s12, 0
    %p116 = por %p114, %p115
    %p117 = scmp.ne.s32.totalorder %s109, %s111
    %p118 = scmp.eq.s32.totalorder %s17, 1
    %p119 = por %p117, %p118
    %p120 = scmp.ne.s32.totalorder %s111, %s112
    %p121 = scmp.eq.s32.totalorder %s17, 0
    %p122 = por %p120, %p121
    %p123 = scmp.ne.s32.totalorder %s111, %s112
    %p124 = scmp.eq.s32.totalorder %s18, 1
    %p125 = por %p123, %p124
    %p127 = scmp.ne.s32.totalorder %s112, %s126
    %p128 = scmp.eq.s32.totalorder %s18, 0
    %p129 = por %p127, %p128
    %s131 = sadd.s32 %s130, 1
    %p134 = scmp.eq.s32.totalorder %s12, 1
    %p135 = scmp.ne.s32.totalorder %s130, %s132
    %p136 = scmp.eq.s32.totalorder %s12, 0
    %p137 = por %p135, %p136
    %p138 = scmp.ne.s32.totalorder %s130, %s132
    %p139 = scmp.eq.s32.totalorder %s17, 1
    %p140 = por %p138, %p139
    %p141 = scmp.ne.s32.totalorder %s132, %s133
    %p142 = scmp.eq.s32.totalorder %s17, 0
    %p143 = por %p141, %p142
    %p144 = scmp.ne.s32.totalorder %s132, %s133
    %p145 = scmp.eq.s32.totalorder %s18, 1
    %p146 = por %p144, %p145
    %p148 = scmp.ne.s32.totalorder %s133, %s147
    %p149 = scmp.eq.s32.totalorder %s18, 0
    %p150 = por %p148, %p149
    %s151 = ssub.s32 %s12, %s19
    %p152 = scmp.eq.s32.totalorder %s151, 0
    %s154 = sadd.s32 %s153, 1
    %s155 = scalar_select %p152, %s153, %s154
    %p158 = pneg %p152
    %p159 = scmp.eq.s32.totalorder %s12, 1
    %p160 = por %p158, %p159
    %p161 = scmp.ne.s32.totalorder %s153, %s156
    %p162 = scmp.eq.s32.totalorder %s12, 0
    %p163 = por %p161, %p162
    %p164 = scmp.ne.s32.totalorder %s153, %s156
    %p165 = scmp.eq.s32.totalorder %s17, 1
    %p166 = por %p164, %p165
    %p167 = scmp.ne.s32.totalorder %s156, %s157
    %p168 = scmp.eq.s32.totalorder %s17, 0
    %p169 = por %p167, %p168
    %p170 = scmp.ne.s32.totalorder %s156, %s157
    %p171 = scmp.eq.s32.totalorder %s18, 1
    %p172 = por %p170, %p171
    %p174 = scmp.ne.s32.totalorder %s157, %s173
    %p175 = scmp.eq.s32.totalorder %s18, 0
    %p176 = por %p174, %p175
    %p177 = scmp.le.s32.totalorder 1, %s12
    %p178 = scmp.lt.s32.totalorder %s12, 3
    %p179 = pnand %p177, %p178
    %p180 = pneg %p179
    // Predicated region
    $region9: #{vision_model_forward.1} parent=5 // pred_check
      _
    $region10: #{vision_model_forward.1} parent=5 // pred_check_branch
      %182 = sbr.rel (%p179) target = $region12
    $region11: #{vision_model_forward.1} parent=5 // pred_region
      %s183 = ssub.s32 %s12, 1
      // Predicated region
      $region13: #{vision_model_forward.1} parent=11 // pred_check
        %p184 = pneg %p59
      $region14: #{vision_model_forward.1} parent=11 // pred_check_branch
        %186 = sbr.rel (%p184) target = $region16
      $region15: #{vision_model_forward.1} parent=11 // pred_region
        _
      $region16: #{vision_model_forward.1} parent=11 // pred_fallthru
        _
      // Predicated region
      $region17: #{vision_model_forward.1} parent=11 // pred_check
        %p187 = pneg %p80
      $region18: #{vision_model_forward.1} parent=11 // pred_check_branch
        %189 = sbr.rel (%p187) target = $region20
      $region19: #{vision_model_forward.1} parent=11 // pred_region
        _
      $region20: #{vision_model_forward.1} parent=11 // pred_fallthru
        _
      // Predicated region
      $region21: #{vision_model_forward.1} parent=11 // pred_check
        %p190 = pneg %p101
      $region22: #{vision_model_forward.1} parent=11 // pred_check_branch
        %192 = sbr.rel (%p190) target = $region24
      $region23: #{vision_model_forward.1} parent=11 // pred_region
        _
      $region24: #{vision_model_forward.1} parent=11 // pred_fallthru
        _
      // Predicated region
      $region25: #{vision_model_forward.1} parent=11 // pred_check
        %p193 = pneg %p122
      $region26: #{vision_model_forward.1} parent=11 // pred_check_branch
        %195 = sbr.rel (%p193) target = $region28
      $region27: #{vision_model_forward.1} parent=11 // pred_region
        _
      $region28: #{vision_model_forward.1} parent=11 // pred_fallthru
        _
      // Predicated region
      $region29: #{vision_model_forward.1} parent=11 // pred_check
        %p196 = pneg %p143
      $region30: #{vision_model_forward.1} parent=11 // pred_check_branch
        %198 = sbr.rel (%p196) target = $region32
      $region31: #{vision_model_forward.1} parent=11 // pred_region
        _
      $region32: #{vision_model_forward.1} parent=11 // pred_fallthru
        _
    $region12: #{vision_model_forward.1} parent=5 // pred_fallthru
      _
    %p199 = scmp.lt.s32.totalorder %s12, 2
    // Predicated region
    $region33: #{vision_model_forward.1} parent=5 // pred_check
      %p200 = pneg %p199
    $region34: #{vision_model_forward.1} parent=5 // pred_check_branch
      %202 = sbr.rel (%p200) target = $region36
    $region35: #{vision_model_forward.1} parent=5 // pred_region
      // Predicated region
      $region37: #{vision_model_forward.1} parent=35 // pred_check
        %p203 = pneg %p32
      $region38: #{vision_model_forward.1} parent=35 // pred_check_branch
        %205 = sbr.rel (%p203) target = $region40
      $region39: #{vision_model_forward.1} parent=35 // pred_region
        %p206 = scmp.lt.s32.totalorder %s12, 1
        %s207 = scalar_select %p206, %s12, 1
        %s208 = smul.addr %s207, 61
        %s209 = smul.addr %s208, 4
        %s210 = scalar_lea.vmem %s0, %s209
      $region40: #{vision_model_forward.1} parent=35 // pred_fallthru
        _
    $region36: #{vision_model_forward.1} parent=5 // pred_fallthru
      _
    %p211 = scmp.le.s32.totalorder 1, %s12
    %p212 = scmp.lt.s32.totalorder %s12, 3
    %p213 = pnand %p211, %p212
    %p214 = pneg %p213
    // Predicated region
    $region41: #{vision_model_forward.1} parent=5 // pred_check
      _
    $region42: #{vision_model_forward.1} parent=5 // pred_check_branch
      %216 = sbr.rel (%p213) target = $region44
    $region43: #{vision_model_forward.1} parent=5 // pred_region
      %s217 = ssub.s32 %s12, 1
      %p218 = scmp.lt.s32.totalorder %s17, 1
      %s219 = scalar_select %p218, %s17, 1
      %s220 = smul.addr %s219, 61
      %s221 = smul.addr %s220, 4
      %s222 = scalar_lea.vmem %s0, %s221
      %p223 = pneg %p38
      %p224 = pneg %p35
      %p225 = pneg %p59
      %p226 = pneg %p56
      %p227 = pneg %p80
      %p228 = pneg %p77
      %p229 = pneg %p101
      %p230 = pneg %p98
      %p231 = pneg %p122
      %p232 = pneg %p119
      %p233 = pneg %p143
      %p234 = pneg %p140
      %p235 = pneg %p169
      %p236 = pneg %p166
      %p237 = scmp.lt.s32.totalorder %s17, 1
      %s238 = scalar_select %p237, %s17, 1
      %s239 = scalar_lea.vmem %s6, %s238
      %p240 = scmp.lt.s32.totalorder %s17, 1
      %s241 = scalar_select %p240, %s17, 1
      %s242 = smul.addr %s241, 61
      %s243 = smul.addr %s242, 4
      %s244 = scalar_lea.vmem %s0, %s243
      %p245 = scmp.lt.s32.totalorder %s17, 1
      %s246 = scalar_select %p245, %s17, 1
      %s247 = scalar_lea.vmem %s6, %s246
      %v249 = vld [vmem:[%s5] sm:$0x1]
      %v250 = vld [vmem:[%s244] sm:$0xf]
      %v251 = vld [vmem:[%s244 + $0x4] sm:$0xf]
      %v252 = vld [vmem:[%s244 + $0x8] sm:$0xf]
      %v253 = vld [vmem:[%s244 + $0xc] sm:$0xf]
      %v254 = vld [vmem:[%s244 + $0x10] sm:$0xf]
      %v255 = vld [vmem:[%s244 + $0x14] sm:$0xf]
      %v256 = vld [vmem:[%s244 + $0x18] sm:$0xf]
      %v257 = vld [vmem:[%s244 + $0x1c] sm:$0xf]
      %v258 = vld [vmem:[%s244 + $0x20] sm:$0xf]
      %v259 = vld [vmem:[%s244 + $0x24] sm:$0xf]
      %v260 = vld [vmem:[%s244 + $0x28] sm:$0xf]
      %v261 = vld [vmem:[%s244 + $0x2c] sm:$0xf]
      %v262 = vld [vmem:[%s244 + $0x30] sm:$0xf]
      %v263 = vld [vmem:[%s244 + $0x34] sm:$0xf]
      %v264 = vld [vmem:[%s244 + $0x38] sm:$0xf]
      %v265 = vld [vmem:[%s244 + $0x3c] sm:$0xf]
      %v266 = vld [vmem:[%s244 + $0x40] sm:$0xf]
      %v267 = vld [vmem:[%s244 + $0x44] sm:$0xf]
      %v268 = vld [vmem:[%s244 + $0x48] sm:$0xf]
      %v269 = vld [vmem:[%s244 + $0x4c] sm:$0xf]
      %v270 = vld [vmem:[%s244 + $0x50] sm:$0xf]
      %v271 = vld [vmem:[%s244 + $0x54] sm:$0xf]
      %v272 = vld [vmem:[%s244 + $0x58] sm:$0xf]
      %v273 = vld [vmem:[%s244 + $0x5c] sm:$0xf]
      %v274 = vld [vmem:[%s244 + $0x60] sm:$0xf]
      %v275 = vld [vmem:[%s244 + $0x64] sm:$0xf]
      %v276 = vld [vmem:[%s244 + $0x68] sm:$0xf]
      %v277 = vld [vmem:[%s244 + $0x6c] sm:$0xf]
      %v278 = vld [vmem:[%s244 + $0x70] sm:$0xf]
      %v279 = vld [vmem:[%s244 + $0x74] sm:$0xf]
      %v280 = vld [vmem:[%s244 + $0x78] sm:$0xf]
      %v281 = vld [vmem:[%s244 + $0x7c] sm:$0xf]
      %v282 = vld [vmem:[%s244 + $0x80] sm:$0xf]
      %v283 = vld [vmem:[%s244 + $0x84] sm:$0xf]
      %v284 = vld [vmem:[%s244 + $0x88] sm:$0xf]
      %v285 = vld [vmem:[%s244 + $0x8c] sm:$0xf]
      %v286 = vld [vmem:[%s244 + $0x90] sm:$0xf]
      %v287 = vld [vmem:[%s244 + $0x94] sm:$0xf]
      %v288 = vld [vmem:[%s244 + $0x98] sm:$0xf]
      %v289 = vld [vmem:[%s244 + $0x9c] sm:$0xf]
      %v290 = vld [vmem:[%s244 + $0xa0] sm:$0xf]
      %v291 = vld [vmem:[%s244 + $0xa4] sm:$0xf]
      %v292 = vld [vmem:[%s244 + $0xa8] sm:$0xf]
      %v293 = vld [vmem:[%s244 + $0xac] sm:$0xf]
      %v294 = vld [vmem:[%s244 + $0xb0] sm:$0xf]
      %v295 = vld [vmem:[%s244 + $0xb4] sm:$0xf]
      %v296 = vld [vmem:[%s244 + $0xb8] sm:$0xf]
      %v297 = vld [vmem:[%s244 + $0xbc] sm:$0xf]
      %v298 = vld [vmem:[%s244 + $0xc0] sm:$0xf]
      %v299 = vld [vmem:[%s244 + $0xc4] sm:$0xf]
      %v300 = vld [vmem:[%s244 + $0xc8] sm:$0xf]
      %v301 = vld [vmem:[%s244 + $0xcc] sm:$0xf]
      %v302 = vld [vmem:[%s244 + $0xd0] sm:$0xf]
      %v303 = vld [vmem:[%s244 + $0xd4] sm:$0xf]
      %v304 = vld [vmem:[%s244 + $0xd8] sm:$0xf]
      %v305 = vld [vmem:[%s244 + $0xdc] sm:$0xf]
      %v306 = vld [vmem:[%s244 + $0xe0] sm:$0xf]
      %v307 = vld [vmem:[%s244 + $0xe4] sm:$0xf]
      %v308 = vld [vmem:[%s244 + $0xe8] sm:$0xf]
      %v309 = vld [vmem:[%s244 + $0xec] sm:$0xf]
      %v310 = vld [vmem:[%s244 + $0xf0] sm:$0x3]
      %v311 = vld [vmem:[%s1] sm:$0xf]
      %v312 = vld [vmem:[%s1 + $0x4] sm:$0xf]
      %v313 = vld [vmem:[%s1 + $0x8] sm:$0xf]
      %v314 = vld [vmem:[%s1 + $0xc] sm:$0xf]
      %v315 = vld [vmem:[%s1 + $0x10] sm:$0xf]
      %v316 = vld [vmem:[%s1 + $0x14] sm:$0xf]
      %v317 = vld [vmem:[%s1 + $0x18] sm:$0xf]
      %v318 = vld [vmem:[%s1 + $0x1c] sm:$0xf]
      %v319 = vld [vmem:[%s1 + $0x20] sm:$0xf]
      %v320 = vld [vmem:[%s1 + $0x24] sm:$0x3]
      %v321 = vlaneseq
      %v322 = vshrl.u32 %v321, 7
      %v323 = vsub.s32 0, %v322
      %v324 = vrot.slane %v249, %v323
      %v386 = vunpack.c.l.b16 %v250
      %v387 = vunpack.c.l.b16 %v251
      %v388 = vunpack.c.l.b16 %v252
      %v389 = vunpack.c.l.b16 %v253
      %v390 = vunpack.c.l.b16 %v254
      %v391 = vunpack.c.l.b16 %v255
      %v392 = vunpack.c.l.b16 %v256
      %v393 = vunpack.c.l.b16 %v257
      %v394 = vunpack.c.l.b16 %v258
      %v395 = vunpack.c.l.b16 %v259
      %v396 = vunpack.c.l.b16 %v260
      %v397 = vunpack.c.l.b16 %v261
      %v398 = vunpack.c.l.b16 %v262
      %v399 = vunpack.c.l.b16 %v263
      %v400 = vunpack.c.l.b16 %v264
      %v401 = vunpack.c.l.b16 %v265
      %v402 = vunpack.c.l.b16 %v266
      %v403 = vunpack.c.l.b16 %v267
      %v404 = vunpack.c.l.b16 %v268
      %v405 = vunpack.c.l.b16 %v269
      %v406 = vunpack.c.l.b16 %v270
      %v407 = vunpack.c.l.b16 %v271
      %v408 = vunpack.c.l.b16 %v272
      %v409 = vunpack.c.l.b16 %v273
      %v410 = vunpack.c.l.b16 %v274
      %v411 = vunpack.c.l.b16 %v275
      %v412 = vunpack.c.l.b16 %v276
      %v413 = vunpack.c.l.b16 %v277
      %v414 = vunpack.c.l.b16 %v278
      %v415 = vunpack.c.l.b16 %v279
      %v416 = vunpack.c.l.b16 %v280
      %v417 = vunpack.c.l.b16 %v281
      %v418 = vunpack.c.l.b16 %v282
      %v419 = vunpack.c.l.b16 %v283
      %v420 = vunpack.c.l.b16 %v284
      %v421 = vunpack.c.l.b16 %v285
      %v422 = vunpack.c.l.b16 %v286
      %v423 = vunpack.c.l.b16 %v287
      %v424 = vunpack.c.l.b16 %v288
      %v425 = vunpack.c.l.b16 %v289
      %v426 = vunpack.c.l.b16 %v290
      %v427 = vunpack.c.l.b16 %v291
      %v428 = vunpack.c.l.b16 %v292
      %v429 = vunpack.c.l.b16 %v293
      %v430 = vunpack.c.l.b16 %v294
      %v431 = vunpack.c.l.b16 %v295
      %v432 = vunpack.c.l.b16 %v296
      %v433 = vunpack.c.l.b16 %v297
      %v434 = vunpack.c.l.b16 %v298
      %v435 = vunpack.c.l.b16 %v299
      %v436 = vunpack.c.l.b16 %v300
      %v437 = vunpack.c.l.b16 %v301
      %v438 = vunpack.c.l.b16 %v302
      %v439 = vunpack.c.l.b16 %v303
      %v440 = vunpack.c.l.b16 %v304
      %v441 = vunpack.c.l.b16 %v305
      %v442 = vunpack.c.l.b16 %v306
      %v443 = vunpack.c.l.b16 %v307
      %v444 = vunpack.c.l.b16 %v308
      %v445 = vunpack.c.l.b16 %v309
      %v446 = vunpack.c.l.b16 %v310
      %v447 = vpack.c.b16 %v387, %v386
      %v448 = vpack.c.b16 %v389, %v388
      %v449 = vpack.c.b16 %v391, %v390
      %v450 = vpack.c.b16 %v393, %v392
      %v451 = vpack.c.b16 %v395, %v394
      %v452 = vpack.c.b16 %v397, %v396
      %v453 = vpack.c.b16 %v399, %v398
      %v454 = vpack.c.b16 %v401, %v400
      %v455 = vpack.c.b16 %v403, %v402
      %v456 = vpack.c.b16 %v405, %v404
      %v457 = vpack.c.b16 %v407, %v406
      %v458 = vpack.c.b16 %v409, %v408
      %v459 = vpack.c.b16 %v411, %v410
      %v460 = vpack.c.b16 %v413, %v412
      %v461 = vpack.c.b16 %v415, %v414
      %v462 = vpack.c.b16 %v417, %v416
      %v463 = vpack.c.b16 %v419, %v418
      %v464 = vpack.c.b16 %v421, %v420
      %v465 = vpack.c.b16 %v423, %v422
      %v466 = vpack.c.b16 %v425, %v424
      %v467 = vpack.c.b16 %v427, %v426
      %v468 = vpack.c.b16 %v429, %v428
      %v469 = vpack.c.b16 %v431, %v430
      %v470 = vpack.c.b16 %v433, %v432
      %v471 = vpack.c.b16 %v435, %v434
      %v472 = vpack.c.b16 %v437, %v436
      %v473 = vpack.c.b16 %v439, %v438
      %v474 = vpack.c.b16 %v441, %v440
      %v475 = vpack.c.b16 %v443, %v442
      %v476 = vpack.c.b16 %v445, %v444
      %v477 = vpack.c.b16 %v446, %v446
      %v488 = vunpack.c.l.b16 %v311
      %v489 = vunpack.c.l.b16 %v312
      %v490 = vunpack.c.l.b16 %v313
      %v491 = vunpack.c.l.b16 %v314
      %v492 = vunpack.c.l.b16 %v315
      %v493 = vunpack.c.l.b16 %v316
      %v494 = vunpack.c.l.b16 %v317
      %v495 = vunpack.c.l.b16 %v318
      %v496 = vunpack.c.l.b16 %v319
      %v497 = vunpack.c.l.b16 %v320
      %v498 = vpack.c.b16 %v489, %v488
      %v499 = vpack.c.b16 %v491, %v490
      %v500 = vpack.c.b16 %v493, %v492
      %v501 = vpack.c.b16 %v495, %v494
      %v502 = vpack.c.b16 %v497, %v496
      %vm507 = vcmask 613376
      %v509 = vsel %vm507, %v447, 0
      %v512 = vsel %vm507, %v448, 0
      %v515 = vsel %vm507, %v449, 0
      %v518 = vsel %vm507, %v450, 0
      %v521 = vsel %vm507, %v451, 0
      %v524 = vsel %vm507, %v452, 0
      %v527 = vsel %vm507, %v453, 0
      %v530 = vsel %vm507, %v454, 0
      %v533 = vsel %vm507, %v455, 0
      %v536 = vsel %vm507, %v456, 0
      %v539 = vsel %vm507, %v457, 0
      %v542 = vsel %vm507, %v458, 0
      %v545 = vsel %vm507, %v459, 0
      %v548 = vsel %vm507, %v460, 0
      %v551 = vsel %vm507, %v461, 0
      %v554 = vsel %vm507, %v462, 0
      %v557 = vsel %vm507, %v463, 0
      %v560 = vsel %vm507, %v464, 0
      %v563 = vsel %vm507, %v465, 0
      %v566 = vsel %vm507, %v466, 0
      %v569 = vsel %vm507, %v467, 0
      %v572 = vsel %vm507, %v468, 0
      %v575 = vsel %vm507, %v469, 0
      %v578 = vsel %vm507, %v470, 0
      %v581 = vsel %vm507, %v471, 0
      %v584 = vsel %vm507, %v472, 0
      %v587 = vsel %vm507, %v473, 0
      %v590 = vsel %vm507, %v474, 0
      %v593 = vsel %vm507, %v475, 0
      %v596 = vsel %vm507, %v476, 0
      %v599 = vsel %vm507, %v477, 0
      %vm601 = vcmask 1044480
      %vm602 = vcmask 1045504
      %v603 = vsel %vm601, 4294967295, 65535
      %v604 = vsel %vm602, %v603, 0
      %v606 = vand.u32 %v502, %v604
      %608 = vmatprep.subr.bf16.mxu0 0
      %609 = vmatpush1.bf16.msra.mxu0 0
      %610 = vmatprep.subr.bf16.mxu0 0
      %611 = vmatpush1.bf16.msra.mxu0 0
      %612 = vmatprep.subr.bf16.mxu0 0
      %613 = vmatpush1.bf16.msra.mxu0 0
      %614 = vmatprep.subr.bf16.mxu0 0
      %615 = vmatpush1.bf16.msra.mxu0 %v606
      %616 = vmatprep.subr.bf16.mxu0 0
      %617 = vmatpush1.bf16.msra.mxu0 %v501
      %618 = vmatprep.subr.bf16.mxu0 0
      %619 = vmatpush1.bf16.msra.mxu0 %v500
      %620 = vmatprep.subr.bf16.mxu0 0
      %621 = vmatpush1.bf16.msra.mxu0 %v499
      %622 = vmatprep.subr.bf16.mxu0 0
      %623 = vmatpush1.bf16.msra.mxu0 %v498
      %624 = vmatprep.subr.bf16.mxu0 0
      %625 = vmatpush2.bf16.msra.mxu0 0
      %626 = vmatprep.subr.bf16.mxu0 0
      %627 = vmatpush2.bf16.msra.mxu0 0
      %628 = vmatprep.subr.bf16.mxu0 0
      %629 = vmatpush2.bf16.msra.mxu0 0
      %630 = vmatprep.subr.bf16.mxu0 0
      %631 = vmatpush2.bf16.msra.mxu0 0
      %632 = vmatprep.subr.bf16.mxu0 0
      %633 = vmatpush2.bf16.msra.mxu0 0
      %634 = vmatprep.subr.bf16.mxu0 0
      %635 = vmatpush2.bf16.msra.mxu0 0
      %636 = vmatprep.subr.bf16.mxu0 0
      %637 = vmatpush2.bf16.msra.mxu0 0
      %638 = vmatprep.subr.bf16.mxu0 0
      %639 = vmatpush2.bf16.msra.mxu0 0
      %640 = vmatprep.mubr.bf16.mxu0 0
      %641 = vmatmul.mubr.bf16.gmra.mxu0 %v509
      %v642 = vpop.f32.mrf.mxu0
      %v643 = vadd.f32 %v324, %v642
      %v644 = vpop.f32.mrf.mxu0
      %v645 = vpop.f32.mrf.mxu0
      %v646 = vadd.f32 %v324, %v645
      %v647 = vpop.f32.mrf.mxu0
      %648 = vmatprep.mubr.bf16.mxu0 0
      %649 = vmatmul.mubr.bf16.gmra.mxu0 %v512
      %v650 = vpop.f32.mrf.mxu0
      %v651 = vadd.f32 %v324, %v650
      %v652 = vpop.f32.mrf.mxu0
      %v653 = vpop.f32.mrf.mxu0
      %v654 = vadd.f32 %v324, %v653
      %v655 = vpop.f32.mrf.mxu0
      %656 = vmatprep.mubr.bf16.mxu0 0
      %657 = vmatmul.mubr.bf16.gmra.mxu0 %v515
      %v658 = vpop.f32.mrf.mxu0
      %v659 = vadd.f32 %v324, %v658
      %v660 = vpop.f32.mrf.mxu0
      %v661 = vpop.f32.mrf.mxu0
      %v662 = vadd.f32 %v324, %v661
      %v663 = vpop.f32.mrf.mxu0
      %664 = vmatprep.mubr.bf16.mxu0 0
      %665 = vmatmul.mubr.bf16.gmra.mxu0 %v518
      %v666 = vpop.f32.mrf.mxu0
      %v667 = vadd.f32 %v324, %v666
      %v668 = vpop.f32.mrf.mxu0
      %v669 = vpop.f32.mrf.mxu0
      %v670 = vadd.f32 %v324, %v669
      %v671 = vpop.f32.mrf.mxu0
      %672 = vmatprep.mubr.bf16.mxu0 0
      %673 = vmatmul.mubr.bf16.gmra.mxu0 %v521
      %v674 = vpop.f32.mrf.mxu0
      %v675 = vadd.f32 %v324, %v674
      %v676 = vpop.f32.mrf.mxu0
      %v677 = vpop.f32.mrf.mxu0
      %v678 = vadd.f32 %v324, %v677
      %v679 = vpop.f32.mrf.mxu0
      %680 = vmatprep.mubr.bf16.mxu0 0
      %681 = vmatmul.mubr.bf16.gmra.mxu0 %v524
      %v682 = vpop.f32.mrf.mxu0
      %v683 = vadd.f32 %v324, %v682
      %v684 = vpop.f32.mrf.mxu0
      %v685 = vpop.f32.mrf.mxu0
      %v686 = vadd.f32 %v324, %v685
      %v687 = vpop.f32.mrf.mxu0
      %688 = vmatprep.mubr.bf16.mxu0 0
      %689 = vmatmul.mubr.bf16.gmra.mxu0 %v527
      %v690 = vpop.f32.mrf.mxu0
      %v691 = vadd.f32 %v324, %v690
      %v692 = vpop.f32.mrf.mxu0
      %v693 = vpop.f32.mrf.mxu0
      %v694 = vadd.f32 %v324, %v693
      %v695 = vpop.f32.mrf.mxu0
      %696 = vmatprep.mubr.bf16.mxu0 0
      %697 = vmatmul.mubr.bf16.gmra.mxu0 %v530
      %v698 = vpop.f32.mrf.mxu0
      %v699 = vadd.f32 %v324, %v698
      %v700 = vpop.f32.mrf.mxu0
      %v701 = vpop.f32.mrf.mxu0
      %v702 = vadd.f32 %v324, %v701
      %v703 = vpop.f32.mrf.mxu0
      %704 = vmatprep.mubr.bf16.mxu0 0
      %705 = vmatmul.mubr.bf16.gmra.mxu0 %v533
      %v706 = vpop.f32.mrf.mxu0
      %v707 = vadd.f32 %v324, %v706
      %v708 = vpop.f32.mrf.mxu0
      %v709 = vpop.f32.mrf.mxu0
      %v710 = vadd.f32 %v324, %v709
      %v711 = vpop.f32.mrf.mxu0
      %712 = vmatprep.mubr.bf16.mxu0 0
      %713 = vmatmul.mubr.bf16.gmra.mxu0 %v536
      %v714 = vpop.f32.mrf.mxu0
      %v715 = vadd.f32 %v324, %v714
      %v716 = vpop.f32.mrf.mxu0
      %v717 = vpop.f32.mrf.mxu0
      %v718 = vadd.f32 %v324, %v717
      %v719 = vpop.f32.mrf.mxu0
      %720 = vmatprep.mubr.bf16.mxu0 0
      %721 = vmatmul.mubr.bf16.gmra.mxu0 %v539
      %v722 = vpop.f32.mrf.mxu0
      %v723 = vadd.f32 %v324, %v722
      %v724 = vpop.f32.mrf.mxu0
      %v725 = vpop.f32.mrf.mxu0
      %v726 = vadd.f32 %v324, %v725
      %v727 = vpop.f32.mrf.mxu0
      %728 = vmatprep.mubr.bf16.mxu0 0
      %729 = vmatmul.mubr.bf16.gmra.mxu0 %v542
      %v730 = vpop.f32.mrf.mxu0
      %v731 = vadd.f32 %v324, %v730
      %v732 = vpop.f32.mrf.mxu0
      %v733 = vpop.f32.mrf.mxu0
      %v734 = vadd.f32 %v324, %v733
      %v735 = vpop.f32.mrf.mxu0
      %736 = vmatprep.mubr.bf16.mxu0 0
      %737 = vmatmul.mubr.bf16.gmra.mxu0 %v545
      %v738 = vpop.f32.mrf.mxu0
      %v739 = vadd.f32 %v324, %v738
      %v740 = vpop.f32.mrf.mxu0
      %v741 = vpop.f32.mrf.mxu0
      %v742 = vadd.f32 %v324, %v741
      %v743 = vpop.f32.mrf.mxu0
      %744 = vmatprep.mubr.bf16.mxu0 0
      %745 = vmatmul.mubr.bf16.gmra.mxu0 %v548
      %v746 = vpop.f32.mrf.mxu0
      %v747 = vadd.f32 %v324, %v746
      %v748 = vpop.f32.mrf.mxu0
      %v749 = vpop.f32.mrf.mxu0
      %v750 = vadd.f32 %v324, %v749
      %v751 = vpop.f32.mrf.mxu0
      %752 = vmatprep.mubr.bf16.mxu0 0
      %753 = vmatmul.mubr.bf16.gmra.mxu0 %v551
      %v754 = vpop.f32.mrf.mxu0
      %v755 = vadd.f32 %v324, %v754
      %v756 = vpop.f32.mrf.mxu0
      %v757 = vpop.f32.mrf.mxu0
      %v758 = vadd.f32 %v324, %v757
      %v759 = vpop.f32.mrf.mxu0
      %760 = vmatprep.mubr.bf16.mxu0 0
      %761 = vmatmul.mubr.bf16.gmra.mxu0 %v554
      %v762 = vpop.f32.mrf.mxu0
      %v763 = vadd.f32 %v324, %v762
      %v764 = vpop.f32.mrf.mxu0
      %v765 = vpop.f32.mrf.mxu0
      %v766 = vadd.f32 %v324, %v765
      %v767 = vpop.f32.mrf.mxu0
      %768 = vmatprep.mubr.bf16.mxu0 0
      %769 = vmatmul.mubr.bf16.gmra.mxu0 %v557
      %v770 = vpop.f32.mrf.mxu0
      %v771 = vadd.f32 %v324, %v770
      %v772 = vpop.f32.mrf.mxu0
      %v773 = vpop.f32.mrf.mxu0
      %v774 = vadd.f32 %v324, %v773
      %v775 = vpop.f32.mrf.mxu0
      %776 = vmatprep.mubr.bf16.mxu0 0
      %777 = vmatmul.mubr.bf16.gmra.mxu0 %v560
      %v778 = vpop.f32.mrf.mxu0
      %v779 = vadd.f32 %v324, %v778
      %v780 = vpop.f32.mrf.mxu0
      %v781 = vpop.f32.mrf.mxu0
      %v782 = vadd.f32 %v324, %v781
      %v783 = vpop.f32.mrf.mxu0
      %784 = vmatprep.mubr.bf16.mxu0 0
      %785 = vmatmul.mubr.bf16.gmra.mxu0 %v563
      %v786 = vpop.f32.mrf.mxu0
      %v787 = vadd.f32 %v324, %v786
      %v788 = vpop.f32.mrf.mxu0
      %v789 = vpop.f32.mrf.mxu0
      %v790 = vadd.f32 %v324, %v789
      %v791 = vpop.f32.mrf.mxu0
      %792 = vmatprep.mubr.bf16.mxu0 0
      %793 = vmatmul.mubr.bf16.gmra.mxu0 %v566
      %v794 = vpop.f32.mrf.mxu0
      %v795 = vadd.f32 %v324, %v794
      %v796 = vpop.f32.mrf.mxu0
      %v797 = vpop.f32.mrf.mxu0
      %v798 = vadd.f32 %v324, %v797
      %v799 = vpop.f32.mrf.mxu0
      %800 = vmatprep.mubr.bf16.mxu0 0
      %801 = vmatmul.mubr.bf16.gmra.mxu0 %v569
      %v802 = vpop.f32.mrf.mxu0
      %v803 = vadd.f32 %v324, %v802
      %v804 = vpop.f32.mrf.mxu0
      %v805 = vpop.f32.mrf.mxu0
      %v806 = vadd.f32 %v324, %v805
      %v807 = vpop.f32.mrf.mxu0
      %808 = vmatprep.mubr.bf16.mxu0 0
      %809 = vmatmul.mubr.bf16.gmra.mxu0 %v572
      %v810 = vpop.f32.mrf.mxu0
      %v811 = vadd.f32 %v324, %v810
      %v812 = vpop.f32.mrf.mxu0
      %v813 = vpop.f32.mrf.mxu0
      %v814 = vadd.f32 %v324, %v813
      %v815 = vpop.f32.mrf.mxu0
      %816 = vmatprep.mubr.bf16.mxu0 0
      %817 = vmatmul.mubr.bf16.gmra.mxu0 %v575
      %v818 = vpop.f32.mrf.mxu0
      %v819 = vadd.f32 %v324, %v818
      %v820 = vpop.f32.mrf.mxu0
      %v821 = vpop.f32.mrf.mxu0
      %v822 = vadd.f32 %v324, %v821
      %v823 = vpop.f32.mrf.mxu0
      %824 = vmatprep.mubr.bf16.mxu0 0
      %825 = vmatmul.mubr.bf16.gmra.mxu0 %v578
      %v826 = vpop.f32.mrf.mxu0
      %v827 = vadd.f32 %v324, %v826
      %v828 = vpop.f32.mrf.mxu0
      %v829 = vpop.f32.mrf.mxu0
      %v830 = vadd.f32 %v324, %v829
      %v831 = vpop.f32.mrf.mxu0
      %832 = vmatprep.mubr.bf16.mxu0 0
      %833 = vmatmul.mubr.bf16.gmra.mxu0 %v581
      %v834 = vpop.f32.mrf.mxu0
      %v835 = vadd.f32 %v324, %v834
      %v836 = vpop.f32.mrf.mxu0
      %v837 = vpop.f32.mrf.mxu0
      %v838 = vadd.f32 %v324, %v837
      %v839 = vpop.f32.mrf.mxu0
      %840 = vmatprep.mubr.bf16.mxu0 0
      %841 = vmatmul.mubr.bf16.gmra.mxu0 %v584
      %v842 = vpop.f32.mrf.mxu0
      %v843 = vadd.f32 %v324, %v842
      %v844 = vpop.f32.mrf.mxu0
      %v845 = vpop.f32.mrf.mxu0
      %v846 = vadd.f32 %v324, %v845
      %v847 = vpop.f32.mrf.mxu0
      %848 = vmatprep.mubr.bf16.mxu0 0
      %849 = vmatmul.mubr.bf16.gmra.mxu0 %v587
      %v850 = vpop.f32.mrf.mxu0
      %v851 = vadd.f32 %v324, %v850
      %v852 = vpop.f32.mrf.mxu0
      %v853 = vpop.f32.mrf.mxu0
      %v854 = vadd.f32 %v324, %v853
      %v855 = vpop.f32.mrf.mxu0
      %856 = vmatprep.mubr.bf16.mxu0 0
      %857 = vmatmul.mubr.bf16.gmra.mxu0 %v590
      %v858 = vpop.f32.mrf.mxu0
      %v859 = vadd.f32 %v324, %v858
      %v860 = vpop.f32.mrf.mxu0
      %v861 = vpop.f32.mrf.mxu0
      %v862 = vadd.f32 %v324, %v861
      %v863 = vpop.f32.mrf.mxu0
      %864 = vmatprep.mubr.bf16.mxu0 0
      %865 = vmatmul.mubr.bf16.gmra.mxu0 %v593
      %v866 = vpop.f32.mrf.mxu0
      %v867 = vadd.f32 %v324, %v866
      %v868 = vpop.f32.mrf.mxu0
      %v869 = vpop.f32.mrf.mxu0
      %v870 = vadd.f32 %v324, %v869
      %v871 = vpop.f32.mrf.mxu0
      %872 = vmatprep.mubr.bf16.mxu0 0
      %873 = vmatmul.mubr.bf16.gmra.mxu0 %v596
      %v874 = vpop.f32.mrf.mxu0
      %v875 = vadd.f32 %v324, %v874
      %v876 = vpop.f32.mrf.mxu0
      %v877 = vpop.f32.mrf.mxu0
      %v878 = vadd.f32 %v324, %v877
      %v879 = vpop.f32.mrf.mxu0
      %880 = vmatprep.mubr.bf16.mxu0 0
      %881 = vmatmul.mubr.bf16.gmra.mxu0 %v599
      %v882 = vpop.f32.mrf.mxu0
      %v883 = vadd.f32 %v324, %v882
      %v884 = vpop.f32.mrf.mxu0
      %v885 = vpop.f32.mrf.mxu0
      %v886 = vpop.f32.mrf.mxu0
      %887 = vdwg.mxu0
      %v888 = vmax.f32 %v643, 0.0
      %v889 = vmax.f32 %v646, 0.0
      %v890 = vmax.f32 %v651, 0.0
      %v891 = vmax.f32 %v654, 0.0
      %v892 = vmax.f32 %v659, 0.0
      %v893 = vmax.f32 %v662, 0.0
      %v894 = vmax.f32 %v667, 0.0
      %v895 = vmax.f32 %v670, 0.0
      %v896 = vmax.f32 %v675, 0.0
      %v897 = vmax.f32 %v678, 0.0
      %v898 = vmax.f32 %v683, 0.0
      %v899 = vmax.f32 %v686, 0.0
      %v900 = vmax.f32 %v691, 0.0
      %v901 = vmax.f32 %v694, 0.0
      %v902 = vmax.f32 %v699, 0.0
      %v903 = vmax.f32 %v702, 0.0
      %v904 = vmax.f32 %v707, 0.0
      %v905 = vmax.f32 %v710, 0.0
      %v906 = vmax.f32 %v715, 0.0
      %v907 = vmax.f32 %v718, 0.0
      %v908 = vmax.f32 %v723, 0.0
      %v909 = vmax.f32 %v726, 0.0
      %v910 = vmax.f32 %v731, 0.0
      %v911 = vmax.f32 %v734, 0.0
      %v912 = vmax.f32 %v739, 0.0
      %v913 = vmax.f32 %v742, 0.0
      %v914 = vmax.f32 %v747, 0.0
      %v915 = vmax.f32 %v750, 0.0
      %v916 = vmax.f32 %v755, 0.0
      %v917 = vmax.f32 %v758, 0.0
      %v918 = vmax.f32 %v763, 0.0
      %v919 = vmax.f32 %v766, 0.0
      %v920 = vmax.f32 %v771, 0.0
      %v921 = vmax.f32 %v774, 0.0
      %v922 = vmax.f32 %v779, 0.0
      %v923 = vmax.f32 %v782, 0.0
      %v924 = vmax.f32 %v787, 0.0
      %v925 = vmax.f32 %v790, 0.0
      %v926 = vmax.f32 %v795, 0.0
      %v927 = vmax.f32 %v798, 0.0
      %v928 = vmax.f32 %v803, 0.0
      %v929 = vmax.f32 %v806, 0.0
      %v930 = vmax.f32 %v811, 0.0
      %v931 = vmax.f32 %v814, 0.0
      %v932 = vmax.f32 %v819, 0.0
      %v933 = vmax.f32 %v822, 0.0
      %v934 = vmax.f32 %v827, 0.0
      %v935 = vmax.f32 %v830, 0.0
      %v936 = vmax.f32 %v835, 0.0
      %v937 = vmax.f32 %v838, 0.0
      %v938 = vmax.f32 %v843, 0.0
      %v939 = vmax.f32 %v846, 0.0
      %v940 = vmax.f32 %v851, 0.0
      %v941 = vmax.f32 %v854, 0.0
      %v942 = vmax.f32 %v859, 0.0
      %v943 = vmax.f32 %v862, 0.0
      %v944 = vmax.f32 %v867, 0.0
      %v945 = vmax.f32 %v870, 0.0
      %v946 = vmax.f32 %v875, 0.0
      %v947 = vmax.f32 %v878, 0.0
      %v948 = vmax.f32 %v883, 0.0
      %v949 = vpack.c.bf16 %v889, %v888
      %v950 = vpack.c.bf16 %v891, %v890
      %v951 = vpack.c.bf16 %v893, %v892
      %v952 = vpack.c.bf16 %v895, %v894
      %v953 = vpack.c.bf16 %v897, %v896
      %v954 = vpack.c.bf16 %v899, %v898
      %v955 = vpack.c.bf16 %v901, %v900
      %v956 = vpack.c.bf16 %v903, %v902
      %v957 = vpack.c.bf16 %v905, %v904
      %v958 = vpack.c.bf16 %v907, %v906
      %v959 = vpack.c.bf16 %v909, %v908
      %v960 = vpack.c.bf16 %v911, %v910
      %v961 = vpack.c.bf16 %v913, %v912
      %v962 = vpack.c.bf16 %v915, %v914
      %v963 = vpack.c.bf16 %v917, %v916
      %v964 = vpack.c.bf16 %v919, %v918
      %v965 = vpack.c.bf16 %v921, %v920
      %v966 = vpack.c.bf16 %v923, %v922
      %v967 = vpack.c.bf16 %v925, %v924
      %v968 = vpack.c.bf16 %v927, %v926
      %v969 = vpack.c.bf16 %v929, %v928
      %v970 = vpack.c.bf16 %v931, %v930
      %v971 = vpack.c.bf16 %v933, %v932
      %v972 = vpack.c.bf16 %v935, %v934
      %v973 = vpack.c.bf16 %v937, %v936
      %v974 = vpack.c.bf16 %v939, %v938
      %v975 = vpack.c.bf16 %v941, %v940
      %v976 = vpack.c.bf16 %v943, %v942
      %v977 = vpack.c.bf16 %v945, %v944
      %v978 = vpack.c.bf16 %v947, %v946
      %v979 = vpack.c.bf16 %v948, %v948
      %v980 = vld [vmem:[%s2] sm:$0xff]
      %v981 = vld [vmem:[%s2 + $0x8] sm:$0xff]
      %v982 = vld [vmem:[%s2 + $0x10] sm:$0xff]
      %v983 = vld [vmem:[%s2 + $0x18] sm:$0xff]
      %v984 = vld [vmem:[%s2 + $0x20] sm:$0xff]
      %v985 = vld [vmem:[%s2 + $0x28] sm:$0xff]
      %v986 = vld [vmem:[%s2 + $0x30] sm:$0xff]
      %v987 = vld [vmem:[%s2 + $0x38] sm:$0xff]
      %v988 = vld [vmem:[%s2 + $0x40] sm:$0x33]
      %v989 = vld [vmem:[%s2 + $0x48] sm:$0x33]
      %v1000 = vunpack.c.l.b16 %v980
      %v1001 = vunpack.c.h.b16 %v980
      %v1002 = vunpack.c.l.b16 %v981
      %v1003 = vunpack.c.h.b16 %v981
      %v1004 = vunpack.c.l.b16 %v982
      %v1005 = vunpack.c.h.b16 %v982
      %v1006 = vunpack.c.l.b16 %v983
      %v1007 = vunpack.c.h.b16 %v983
      %v1008 = vunpack.c.l.b16 %v984
      %v1009 = vunpack.c.h.b16 %v984
      %v1010 = vunpack.c.l.b16 %v985
      %v1011 = vunpack.c.h.b16 %v985
      %v1012 = vunpack.c.l.b16 %v986
      %v1013 = vunpack.c.h.b16 %v986
      %v1014 = vunpack.c.l.b16 %v987
      %v1015 = vunpack.c.h.b16 %v987
      %v1016 = vunpack.c.l.b16 %v988
      %v1017 = vunpack.c.h.b16 %v988
      %v1018 = vunpack.c.l.b16 %v989
      %v1019 = vunpack.c.h.b16 %v989
      %v1020 = vpack.c.b16 %v1004, %v1000
      %v1021 = vpack.c.b16 %v1005, %v1001
      %v1022 = vpack.c.b16 %v1006, %v1002
      %v1023 = vpack.c.b16 %v1007, %v1003
      %v1024 = vpack.c.b16 %v1012, %v1008
      %v1025 = vpack.c.b16 %v1013, %v1009
      %v1026 = vpack.c.b16 %v1014, %v1010
      %v1027 = vpack.c.b16 %v1015, %v1011
      %v1028 = vpack.c.b16 %v1016, %v1016
      %v1029 = vpack.c.b16 %v1017, %v1017
      %v1030 = vpack.c.b16 %v1018, %v1018
      %v1031 = vpack.c.b16 %v1019, %v1019
      %vm1041 = vcmask 818176
      %v1043 = vsel %vm1041, %v1023, 0
      %v1046 = vsel %vm1041, %v1027, 0
      %v1049 = vsel %vm1041, %v1031, 0
      %vm1051 = vcmask 1041408
      %v1053 = vsel %vm1051, %v979, 0
      %1055 = vmatprep.subr.bf16.mxu0 0
      %1056 = vmatpush1.bf16.msra.mxu0 %v956
      %1057 = vmatprep.subr.bf16.mxu0 0
      %1058 = vmatpush1.bf16.msra.mxu0 %v955
      %1059 = vmatprep.subr.bf16.mxu0 0
      %1060 = vmatpush1.bf16.msra.mxu0 %v954
      %1061 = vmatprep.subr.bf16.mxu0 0
      %1062 = vmatpush1.bf16.msra.mxu0 %v953
      %1063 = vmatprep.subr.bf16.mxu0 0
      %1064 = vmatpush1.bf16.msra.mxu0 %v952
      %1065 = vmatprep.subr.bf16.mxu0 0
      %1066 = vmatpush1.bf16.msra.mxu0 %v951
      %1067 = vmatprep.subr.bf16.mxu0 0
      %1068 = vmatpush1.bf16.msra.mxu0 %v950
      %1069 = vmatprep.subr.bf16.mxu0 0
      %1070 = vmatpush1.bf16.msra.mxu0 %v949
      %1071 = vmatprep.subr.bf16.mxu0 0
      %1072 = vmatpush2.bf16.msra.mxu0 %v964
      %1073 = vmatprep.subr.bf16.mxu0 0
      %1074 = vmatpush2.bf16.msra.mxu0 %v963
      %1075 = vmatprep.subr.bf16.mxu0 0
      %1076 = vmatpush2.bf16.msra.mxu0 %v962
      %1077 = vmatprep.subr.bf16.mxu0 0
      %1078 = vmatpush2.bf16.msra.mxu0 %v961
      %1079 = vmatprep.subr.bf16.mxu0 0
      %1080 = vmatpush2.bf16.msra.mxu0 %v960
      %1081 = vmatprep.subr.bf16.mxu0 0
      %1082 = vmatpush2.bf16.msra.mxu0 %v959
      %1083 = vmatprep.subr.bf16.mxu0 0
      %1084 = vmatpush2.bf16.msra.mxu0 %v958
      %1085 = vmatprep.subr.bf16.mxu0 0
      %1086 = vmatpush2.bf16.msra.mxu0 %v957
      %1087 = vmatprep.mubr.bf16.mxu0 %v1021
      %1088 = vmatmul.mubr.bf16.gmra.mxu0 %v1020
      %v1089 = vpop.f32.mrf.mxu0
      %v1090 = vadd.f32 0.0, %v1089
      %v1091 = vpop.f32.mrf.mxu0
      %v1092 = vpop.f32.mrf.mxu0
      %v1093 = vadd.f32 0.0, %v1092
      %v1094 = vpop.f32.mrf.mxu0
      %1095 = vmatprep.mubr.bf16.mxu0 %v1025
      %1096 = vmatmul.mubr.bf16.gmra.mxu0 %v1024
      %v1097 = vpop.f32.mrf.mxu0
      %v1098 = vadd.f32 0.0, %v1097
      %v1099 = vpop.f32.mrf.mxu0
      %v1100 = vpop.f32.mrf.mxu0
      %v1101 = vadd.f32 0.0, %v1100
      %v1102 = vpop.f32.mrf.mxu0
      %1103 = vmatprep.mubr.bf16.mxu0 %v1029
      %1104 = vmatmul.mubr.bf16.gmra.mxu0 %v1028
      %v1105 = vpop.f32.mrf.mxu0
      %v1106 = vadd.f32 0.0, %v1105
      %v1107 = vpop.f32.mrf.mxu0
      %v1108 = vpop.f32.mrf.mxu0
      %v1109 = vpop.f32.mrf.mxu0
      %1110 = vdwg.mxu0
      %1111 = vmatprep.subr.bf16.mxu0 0
      %1112 = vmatpush1.bf16.msra.mxu0 %v972
      %1113 = vmatprep.subr.bf16.mxu0 0
      %1114 = vmatpush1.bf16.msra.mxu0 %v971
      %1115 = vmatprep.subr.bf16.mxu0 0
      %1116 = vmatpush1.bf16.msra.mxu0 %v970
      %1117 = vmatprep.subr.bf16.mxu0 0
      %1118 = vmatpush1.bf16.msra.mxu0 %v969
      %1119 = vmatprep.subr.bf16.mxu0 0
      %1120 = vmatpush1.bf16.msra.mxu0 %v968
      %1121 = vmatprep.subr.bf16.mxu0 0
      %1122 = vmatpush1.bf16.msra.mxu0 %v967
      %1123 = vmatprep.subr.bf16.mxu0 0
      %1124 = vmatpush1.bf16.msra.mxu0 %v966
      %1125 = vmatprep.subr.bf16.mxu0 0
      %1126 = vmatpush1.bf16.msra.mxu0 %v965
      %1127 = vmatprep.subr.bf16.mxu0 0
      %1128 = vmatpush2.bf16.msra.mxu0 0
      %1129 = vmatprep.subr.bf16.mxu0 0
      %1130 = vmatpush2.bf16.msra.mxu0 %v1053
      %1131 = vmatprep.subr.bf16.mxu0 0
      %1132 = vmatpush2.bf16.msra.mxu0 %v978
      %1133 = vmatprep.subr.bf16.mxu0 0
      %1134 = vmatpush2.bf16.msra.mxu0 %v977
      %1135 = vmatprep.subr.bf16.mxu0 0
      %1136 = vmatpush2.bf16.msra.mxu0 %v976
      %1137 = vmatprep.subr.bf16.mxu0 0
      %1138 = vmatpush2.bf16.msra.mxu0 %v975
      %1139 = vmatprep.subr.bf16.mxu0 0
      %1140 = vmatpush2.bf16.msra.mxu0 %v974
      %1141 = vmatprep.subr.bf16.mxu0 0
      %1142 = vmatpush2.bf16.msra.mxu0 %v973
      %1143 = vmatprep.mubr.bf16.mxu0 %v1043
      %1144 = vmatmul.mubr.bf16.gmra.mxu0 %v1022
      %v1145 = vpop.f32.mrf.mxu0
      %v1146 = vadd.f32 %v1090, %v1145
      %v1147 = vpop.f32.mrf.mxu0
      %v1148 = vpop.f32.mrf.mxu0
      %v1149 = vadd.f32 %v1093, %v1148
      %v1150 = vpop.f32.mrf.mxu0
      %1151 = vmatprep.mubr.bf16.mxu0 %v1046
      %1152 = vmatmul.mubr.bf16.gmra.mxu0 %v1026
      %v1153 = vpop.f32.mrf.mxu0
      %v1154 = vadd.f32 %v1098, %v1153
      %v1155 = vpop.f32.mrf.mxu0
      %v1156 = vpop.f32.mrf.mxu0
      %v1157 = vadd.f32 %v1101, %v1156
      %v1158 = vpop.f32.mrf.mxu0
      %1159 = vmatprep.mubr.bf16.mxu0 %v1049
      %1160 = vmatmul.mubr.bf16.gmra.mxu0 %v1030
      %v1161 = vpop.f32.mrf.mxu0
      %v1162 = vadd.f32 %v1106, %v1161
      %v1163 = vpop.f32.mrf.mxu0
      %v1164 = vpop.f32.mrf.mxu0
      %v1165 = vpop.f32.mrf.mxu0
      %1166 = vdwg.mxu0
      %vm1167 = vcmask 130048
      %1168 = vst.msk [vmem:[#allocation2] sm:$0xff] %vm1167, %v1146
      %1169 = vst.msk [vmem:[#allocation2 + $0x8] sm:$0xff] %vm1167, %v1149
      %1170 = vst.msk [vmem:[#allocation2 + $0x10] sm:$0xff] %vm1167, %v1154
      %1171 = vst.msk [vmem:[#allocation2 + $0x18] sm:$0xff] %vm1167, %v1157
      %vm1172 = vcmask 125952
      %1173 = vst.msk [vmem:[#allocation2 + $0x20] sm:$0xf] %vm1172, %v1162
      %v1174 = vld [vmem:[#allocation2] sm:$0xf]
      %1175 = vst.msk [vmem:[#allocation3] sm:$0xf] %vm1172, %v1174
      %v1176 = vld [vmem:[#allocation2 + $0x4] sm:$0xf]
      %1178 = vrot.lane.b32.xlu0 %v1176, 16
      %v1179 = vpop.permute.xlu0 %1178
      %vm1181 = vcmask 257152
      %1182 = vst.msk [vmem:[#allocation3] sm:$0xf] %vm1181, %v1179
      %v1183 = vld [vmem:[#allocation2 + $0x8] sm:$0xf]
      %1185 = vrot.lane.b32.xlu0 %v1183, 32
      %v1186 = vpop.permute.xlu0 %1185
      %vm1188 = vcmask 388352
      %1189 = vst.msk [vmem:[#allocation3] sm:$0xf] %vm1188, %v1186
      %v1190 = vld [vmem:[#allocation2 + $0xc] sm:$0xf]
      %1192 = vrot.lane.b32.xlu0 %v1190, 48
      %v1193 = vpop.permute.xlu0 %1192
      %vm1195 = vcmask 519552
      %1196 = vst.msk [vmem:[#allocation3] sm:$0xf] %vm1195, %v1193
      %v1197 = vld [vmem:[#allocation2 + $0x10] sm:$0xf]
      %1199 = vrot.lane.b32.xlu0 %v1197, 64
      %v1200 = vpop.permute.xlu0 %1199
      %vm1202 = vcmask 650752
      %1203 = vst.msk [vmem:[#allocation3] sm:$0xf] %vm1202, %v1200
      %v1204 = vld [vmem:[#allocation2 + $0x14] sm:$0xf]
      %1206 = vrot.lane.b32.xlu0 %v1204, 80
      %v1207 = vpop.permute.xlu0 %1206
      %vm1209 = vcmask 781952
      %1210 = vst.msk [vmem:[#allocation3] sm:$0xf] %vm1209, %v1207
      %v1211 = vld [vmem:[#allocation2 + $0x18] sm:$0xf]
      %1213 = vrot.lane.b32.xlu0 %v1211, 96
      %v1214 = vpop.permute.xlu0 %1213
      %vm1216 = vcmask 913152
      %1217 = vst.msk [vmem:[#allocation3] sm:$0xf] %vm1216, %v1214
      %v1218 = vld [vmem:[#allocation2 + $0x1c] sm:$0xf]
      %1220 = vrot.lane.b32.xlu0 %v1218, 112
      %v1221 = vpop.permute.xlu0 %1220
      %vm1223 = vcmask 1044352
      %1224 = vst.msk [vmem:[#allocation3] sm:$0xf] %vm1223, %v1221
      %v1225 = vld [vmem:[#allocation2 + $0x20] sm:$0xf]
      %1226 = vst.msk [vmem:[#allocation3 + $0x4] sm:$0xf] %vm1172, %v1225
      %v1227 = vld [vmem:[%s5 + $0x1] sm:$0x1]
      %v1228 = vld [vmem:[#allocation3] sm:$0xff]
      %v1230 = vcombine.high %v1228, %v1228
      %v1232 = vpack.c.bf16 %v1228, %v1228
      %v1233 = vpack.c.bf16 %v1230, %v1230
      %v1234 = vld [vmem:[%s3] sm:$0xf]
      %v1235 = vld [vmem:[%s3 + $0x4] sm:$0xf]
      %v1236 = vld [vmem:[%s3 + $0x8] sm:$0xf]
      %v1237 = vld [vmem:[%s3 + $0xc] sm:$0xf]
      %v1238 = vld [vmem:[%s3 + $0x10] sm:$0xf]
      %v1239 = vld [vmem:[%s3 + $0x14] sm:$0xf]
      %v1240 = vld [vmem:[%s3 + $0x18] sm:$0xf]
      %v1241 = vld [vmem:[%s3 + $0x1c] sm:$0xf]
      %v1242 = vld [vmem:[%s3 + $0x20] sm:$0xf]
      %v1243 = vld [vmem:[%s3 + $0x24] sm:$0xf]
      %v1244 = vld [vmem:[%s3 + $0x28] sm:$0xf]
      %v1245 = vld [vmem:[%s3 + $0x2c] sm:$0xf]
      %v1246 = vld [vmem:[%s3 + $0x30] sm:$0xf]
      %v1247 = vld [vmem:[%s3 + $0x34] sm:$0xf]
      %v1248 = vld [vmem:[%s3 + $0x38] sm:$0xf]
      %v1249 = vld [vmem:[%s3 + $0x3c] sm:$0xf]
      %v1250 = vld [vmem:[%s3 + $0x40] sm:$0xf]
      %v1251 = vld [vmem:[%s3 + $0x44] sm:$0xf]
      %v1252 = vlaneseq
      %v1253 = vshrl.u32 %v1252, 7
      %v1254 = vsub.s32 0, %v1253
      %v1255 = vrot.slane %v1227, %v1254
      %v1274 = vunpack.c.l.b16 %v1234
      %v1275 = vunpack.c.l.b16 %v1235
      %v1276 = vunpack.c.l.b16 %v1236
      %v1277 = vunpack.c.l.b16 %v1237
      %v1278 = vunpack.c.l.b16 %v1238
      %v1279 = vunpack.c.l.b16 %v1239
      %v1280 = vunpack.c.l.b16 %v1240
      %v1281 = vunpack.c.l.b16 %v1241
      %v1282 = vunpack.c.l.b16 %v1242
      %v1283 = vunpack.c.l.b16 %v1243
      %v1284 = vunpack.c.l.b16 %v1244
      %v1285 = vunpack.c.l.b16 %v1245
      %v1286 = vunpack.c.l.b16 %v1246
      %v1287 = vunpack.c.l.b16 %v1247
      %v1288 = vunpack.c.l.b16 %v1248
      %v1289 = vunpack.c.l.b16 %v1249
      %v1290 = vunpack.c.l.b16 %v1250
      %v1291 = vunpack.c.l.b16 %v1251
      %v1292 = vpack.c.b16 %v1275, %v1274
      %v1293 = vpack.c.b16 %v1277, %v1276
      %v1294 = vpack.c.b16 %v1279, %v1278
      %v1295 = vpack.c.b16 %v1281, %v1280
      %v1296 = vpack.c.b16 %v1283, %v1282
      %v1297 = vpack.c.b16 %v1285, %v1284
      %v1298 = vpack.c.b16 %v1287, %v1286
      %v1299 = vpack.c.b16 %v1289, %v1288
      %v1300 = vpack.c.b16 %v1291, %v1290
      %v1311 = vsel %vm1167, %v1233, 0
      %1313 = vmatprep.subr.bf16.mxu0 0
      %1314 = vmatpush1.bf16.msra.mxu0 %v1299
      %1315 = vmatprep.subr.bf16.mxu0 0
      %1316 = vmatpush1.bf16.msra.mxu0 %v1298
      %1317 = vmatprep.subr.bf16.mxu0 0
      %1318 = vmatpush1.bf16.msra.mxu0 %v1297
      %1319 = vmatprep.subr.bf16.mxu0 0
      %1320 = vmatpush1.bf16.msra.mxu0 %v1296
      %1321 = vmatprep.subr.bf16.mxu0 0
      %1322 = vmatpush1.bf16.msra.mxu0 %v1295
      %1323 = vmatprep.subr.bf16.mxu0 0
      %1324 = vmatpush1.bf16.msra.mxu0 %v1294
      %1325 = vmatprep.subr.bf16.mxu0 0
      %1326 = vmatpush1.bf16.msra.mxu0 %v1293
      %1327 = vmatprep.subr.bf16.mxu0 0
      %1328 = vmatpush1.bf16.msra.mxu0 %v1292
      %1329 = vmatprep.subr.bf16.mxu0 0
      %1330 = vmatpush2.bf16.msra.mxu0 0
      %1331 = vmatprep.subr.bf16.mxu0 0
      %1332 = vmatpush2.bf16.msra.mxu0 0
      %1333 = vmatprep.subr.bf16.mxu0 0
      %1334 = vmatpush2.bf16.msra.mxu0 0
      %1335 = vmatprep.subr.bf16.mxu0 0
      %1336 = vmatpush2.bf16.msra.mxu0 0
      %1337 = vmatprep.subr.bf16.mxu0 0
      %1338 = vmatpush2.bf16.msra.mxu0 0
      %1339 = vmatprep.subr.bf16.mxu0 0
      %1340 = vmatpush2.bf16.msra.mxu0 0
      %1341 = vmatprep.subr.bf16.mxu0 0
      %1342 = vmatpush2.bf16.msra.mxu0 0
      %1343 = vmatprep.subr.bf16.mxu0 0
      %1344 = vmatpush2.bf16.msra.mxu0 %v1300
      %1345 = vmatprep.mubr.bf16.mxu0 %v1311
      %1346 = vmatmul.mubr.bf16.gmra.mxu0 %v1232
      %v1347 = vpop.f32.mrf.mxu0
      %v1348 = vadd.f32 %v1255, %v1347
      %v1349 = vpop.f32.mrf.mxu0
      %v1350 = vpop.f32.mrf.mxu0
      %v1351 = vpop.f32.mrf.mxu0
      %1352 = vdwg.mxu0
      %v1353 = vmax.f32 %v1348, 0.0
      %vm1354 = vcmask 257024
      %1355 = vst.msk [vmem:[#allocation4] sm:$0xf] %vm1354, %v1353
      %v1356 = vld [vmem:[#allocation4] sm:$0x1]
      %vm1357 = vcmask 253952
      %1358 = vst.msk [vmem:[#allocation5] sm:$0x1] %vm1357, %v1356
      %v1359 = vld [vmem:[#allocation4 + $0x1] sm:$0x1]
      %1361 = vrot.lane.b32.xlu0 %v1359, 32
      %v1362 = vpop.permute.xlu0 %1361
      %vm1364 = vcmask 516352
      %1365 = vst.msk [vmem:[#allocation5] sm:$0x1] %vm1364, %v1362
      %v1366 = vld [vmem:[#allocation4 + $0x2] sm:$0x1]
      %1368 = vrot.lane.b32.xlu0 %v1366, 64
      %v1369 = vpop.permute.xlu0 %1368
      %vm1371 = vcmask 778752
      %1372 = vst.msk [vmem:[#allocation5] sm:$0x1] %vm1371, %v1369
      %v1373 = vld [vmem:[#allocation4 + $0x3] sm:$0x1]
      %1375 = vrot.lane.b32.xlu0 %v1373, 96
      %v1376 = vpop.permute.xlu0 %1375
      %vm1378 = vcmask 1041152
      %1379 = vst.msk [vmem:[#allocation5] sm:$0x1] %vm1378, %v1376
      %v1380 = vld [vmem:[%s5 + $0x2] sm:$0x1]
      %v1381 = vld [vmem:[#allocation5] sm:$0x1]
      %v1382 = vpack.c.bf16 %v1381, %v1381
      %v1383 = vld [vmem:[%s4] sm:$0xf]
      %v1384 = vld [vmem:[%s4 + $0x4] sm:$0xf]
      %v1385 = vld [vmem:[%s4 + $0x8] sm:$0xf]
      %v1386 = vld [vmem:[%s4 + $0xc] sm:$0xf]
      %v1387 = vld [vmem:[%s4 + $0x10] sm:$0xf]
      %v1388 = vld [vmem:[%s4 + $0x14] sm:$0xf]
      %v1389 = vld [vmem:[%s4 + $0x18] sm:$0xf]
      %v1390 = vld [vmem:[%s4 + $0x1c] sm:$0xf]
      %v1391 = vld [vmem:[%s4 + $0x20] sm:$0xf]
      %v1392 = vld [vmem:[%s4 + $0x24] sm:$0xf]
      %v1393 = vld [vmem:[%s4 + $0x28] sm:$0xf]
      %v1394 = vld [vmem:[%s4 + $0x2c] sm:$0xf]
      %v1395 = vld [vmem:[%s4 + $0x30] sm:$0xf]
      %v1396 = vld [vmem:[%s4 + $0x34] sm:$0xf]
      %v1397 = vld [vmem:[%s4 + $0x38] sm:$0xf]
      %v1398 = vld [vmem:[%s4 + $0x3c] sm:$0xf]
      %v1415 = vunpack.c.l.b16 %v1383
      %v1416 = vunpack.c.l.b16 %v1384
      %v1417 = vunpack.c.l.b16 %v1385
      %v1418 = vunpack.c.l.b16 %v1386
      %v1419 = vunpack.c.l.b16 %v1387
      %v1420 = vunpack.c.l.b16 %v1388
      %v1421 = vunpack.c.l.b16 %v1389
      %v1422 = vunpack.c.l.b16 %v1390
      %v1423 = vunpack.c.l.b16 %v1391
      %v1424 = vunpack.c.l.b16 %v1392
      %v1425 = vunpack.c.l.b16 %v1393
      %v1426 = vunpack.c.l.b16 %v1394
      %v1427 = vunpack.c.l.b16 %v1395
      %v1428 = vunpack.c.l.b16 %v1396
      %v1429 = vunpack.c.l.b16 %v1397
      %v1430 = vunpack.c.l.b16 %v1398
      %v1431 = vpack.c.b16 %v1416, %v1415
      %v1432 = vpack.c.b16 %v1418, %v1417
      %v1433 = vpack.c.b16 %v1420, %v1419
      %v1434 = vpack.c.b16 %v1422, %v1421
      %v1435 = vpack.c.b16 %v1424, %v1423
      %v1436 = vpack.c.b16 %v1426, %v1425
      %v1437 = vpack.c.b16 %v1428, %v1427
      %v1438 = vpack.c.b16 %v1430, %v1429
      %1447 = vmatprep.subr.bf16.mxu0 0
      %1448 = vmatpush1.bf16.msra.mxu0 %v1438
      %1449 = vmatprep.subr.bf16.mxu0 0
      %1450 = vmatpush1.bf16.msra.mxu0 %v1437
      %1451 = vmatprep.subr.bf16.mxu0 0
      %1452 = vmatpush1.bf16.msra.mxu0 %v1436
      %1453 = vmatprep.subr.bf16.mxu0 0
      %1454 = vmatpush1.bf16.msra.mxu0 %v1435
      %1455 = vmatprep.subr.bf16.mxu0 0
      %1456 = vmatpush1.bf16.msra.mxu0 %v1434
      %1457 = vmatprep.subr.bf16.mxu0 0
      %1458 = vmatpush1.bf16.msra.mxu0 %v1433
      %1459 = vmatprep.subr.bf16.mxu0 0
      %1460 = vmatpush1.bf16.msra.mxu0 %v1432
      %1461 = vmatprep.subr.bf16.mxu0 0
      %1462 = vmatpush1.bf16.msra.mxu0 %v1431
      %1463 = vmatprep.subr.bf16.mxu0 0
      %1464 = vmatpush2.bf16.msra.mxu0 0
      %1465 = vmatprep.subr.bf16.mxu0 0
      %1466 = vmatpush2.bf16.msra.mxu0 0
      %1467 = vmatprep.subr.bf16.mxu0 0
      %1468 = vmatpush2.bf16.msra.mxu0 0
      %1469 = vmatprep.subr.bf16.mxu0 0
      %1470 = vmatpush2.bf16.msra.mxu0 0
      %1471 = vmatprep.subr.bf16.mxu0 0
      %1472 = vmatpush2.bf16.msra.mxu0 0
      %1473 = vmatprep.subr.bf16.mxu0 0
      %1474 = vmatpush2.bf16.msra.mxu0 0
      %1475 = vmatprep.subr.bf16.mxu0 0
      %1476 = vmatpush2.bf16.msra.mxu0 0
      %1477 = vmatprep.subr.bf16.mxu0 0
      %1478 = vmatpush2.bf16.msra.mxu0 0
      %1479 = vmatprep.mubr.bf16.mxu0 0
      %1480 = vmatmul.mubr.bf16.gmra.mxu0 %v1382
      %v1481 = vpop.f32.mrf.mxu0
      %v1482 = vadd.f32 %v1380, %v1481
      %v1483 = vpop.f32.mrf.mxu0
      %v1484 = vpop.f32.mrf.mxu0
      %v1485 = vpop.f32.mrf.mxu0
      %1486 = vdwg.mxu0
      %v1487 = vmax.f32 %v1482, 0.0
      %v1488 = vld [vmem:[%s5 + $0x3] sm:$0x1]
      %v1489 = vld [vmem:[%s5 + $0x4] sm:$0x1]
      %v1490 = vmul.f32 %v1487, %v1488
      %vm1491 = vcmask 811008
      %v1492 = vsel %vm1491, %v1490, 0.0
      %1493 = vadd.xlane.f32.xlu0 %v1492
      %v1494 = vpop.xlane.xlu0 %1493
      %v1495 = vadd.f32 %v1494, %v1489
      %vm1496 = vcmask 0
      %1497 = vst.msk [vmem:[%s247] sm:$0x1] %vm1496, %v1495
      %p1498 = scmp.lt.s32.totalorder %s17, 1
      %s1499 = scalar_select %p1498, %s17, 1
      %s1500 = scalar_lea.vmem %s6, %s1499
      // Predicated region
      $region45: #{vision_model_forward.1} parent=43 // pred_check
        %p1501 = pneg %p166
      $region46: #{vision_model_forward.1} parent=43 // pred_check_branch
        %1503 = sbr.rel (%p1501) target = $region48
      $region47: #{vision_model_forward.1} parent=43 // pred_region
        _
      $region48: #{vision_model_forward.1} parent=43 // pred_fallthru
        _
    $region44: #{vision_model_forward.1} parent=5 // pred_fallthru
      _
    %p1504 = scmp.le.s32.totalorder 2, %s12
    // Predicated region
    $region49: #{vision_model_forward.1} parent=5 // pred_check
      %p1505 = pneg %p1504
    $region50: #{vision_model_forward.1} parent=5 // pred_check_branch
      %1507 = sbr.rel (%p1505) target = $region52
    $region51: #{vision_model_forward.1} parent=5 // pred_region
      %s1508 = ssub.s32 %s12, 2
      // Predicated region
      $region53: #{vision_model_forward.1} parent=51 // pred_check
        %p1509 = pneg %p172
      $region54: #{vision_model_forward.1} parent=51 // pred_check_branch
        %1511 = sbr.rel (%p1509) target = $region56
      $region55: #{vision_model_forward.1} parent=51 // pred_region
        %p1512 = scmp.lt.s32.totalorder %s18, 1
        %s1513 = scalar_select %p1512, %s18, 1
        %s1514 = scalar_lea.vmem %s6, %s1513
      $region56: #{vision_model_forward.1} parent=51 // pred_fallthru
        _
    $region52: #{vision_model_forward.1} parent=5 // pred_fallthru
      _
  $region6: #{vision_model_forward.1} parent=0 // loop_footer
    %s16 = sadd.s32 1, %s12
  $region7: #{vision_model_forward.1} parent=0 // loop_footer_branch
    %11 = sbr.rel target = $region3
  $region8: #{vision_model_forward.1} parent=0 // loop_exit
    _

</llo_original>
